<compile_context>
chip_gen: v7x
topology: tpu7x:2x2x1
jax: 0.10.0
libtpu: 0.0.40
codegen_flags: <defaults>
</compile_context>

<pallas_src>
import functools

import jax
import jax.numpy as jnp
from jax.experimental import pallas as pl
from jax.experimental.pallas import tpu as pltpu


def _round_up(n, m):
    return ((n + m - 1) // m) * m


def _default_epilogue_dtype():
    """bf16 epilogues on chips with a bf16 VALU (v6e / v7x), f32 otherwise."""
    try:
        kind = jax.devices()[0].device_kind.lower()
    except Exception:
        return jnp.float32
    if any(tag in kind for tag in ("v6", "v7")):
        return jnp.bfloat16
    return jnp.float32


def _const_spec(shape, single_buffer):
    """BlockSpec for a grid-invariant (resident) operand."""
    imap = lambda i: (0, 0)
    if single_buffer:
        try:
            # Never changes block index -> one buffer is enough.
            return pl.BlockSpec(shape, imap, pipeline_mode=pl.Buffered(1))
        except Exception:
            pass  # older Pallas: fall back to default (double) buffering
    return pl.BlockSpec(shape, imap)


def _valuenet_kernel(xt_ref, w1_ref, b1_ref, w2_ref, b2_ref, w3_ref, b3_ref,
                     o_ref, *, ep_dtype):
    """One batch tile.  All activations are (features, tile_b): batch on lanes."""
    xt = xt_ref[...]                                        # (S, tb) float32

    # Layer 1: (H, S) @ (S, tb) on the MXU, f32.  K = state_dim is tiny, so
    # this matmul is negligible work and stays f32 for accuracy.
    h1 = jnp.dot(w1_ref[...], xt, preferred_element_type=jnp.float32)
    # Bias + ReLU in ep_dtype (bf16 on v6e/v7x halves VALU ops; f32 on v5e).
    h1 = jnp.maximum(h1.astype(ep_dtype) + b1_ref[...], 0.0)

    # Layer 2: (H, H) @ (H, tb) -- the dominant matmul.  bf16 operands (by
    # default), f32 MXU accumulation.
    h2 = jnp.dot(w2_ref[...], h1.astype(w2_ref.dtype),
                 preferred_element_type=jnp.float32)
    h2 = jnp.maximum(h2.astype(ep_dtype) + b2_ref[...], 0.0)

    # Value head (256 -> 1): VPU multiply (ep_dtype) + sublane (XLU) reduction
    # with f32 accumulation.  Result is lane-dense along the batch axis.
    v = jnp.sum(h2 * w3_ref[...], axis=0, keepdims=True,
                dtype=jnp.float32) + b3_ref[...]            # (1, tb) f32
    o_ref[...] = v.astype(o_ref.dtype)


def value_net_forward(x, params, *, tile_b=1024, compute_dtype=jnp.bfloat16,
                      epilogue_dtype=None, buffer_consts_once=True):
    """ValueNet forward.

    x:      (B, state_dim) float32
    params: (w1, b1, w2, b2, w3, b3) in PyTorch-native layout:
            w1 (H, S), b1 (H, 1), w2 (H, H), b2 (H, 1), w3 (H, 1), b3 (1, 1)
    tile_b: max batch lanes per grid step (multiple of 128).  VMEM is a
            non-issue here (working set is a few MiB on every generation), so
            use large tiles to amortize the ~0.35 us per-step grid overhead;
            1024 is a good default everywhere, up to 2048 on v6e/v7x.  The
            only v7x-specific constraint -- >= 2 grid steps so both
            TensorCores get work -- is handled automatically below.
    compute_dtype: MXU operand dtype for the dominant 256x256 layer-2 matmul
            (f32 accumulation).  bf16 by default on all generations; x and W1
            stay f32 (layer-1 FLOPs are negligible).
    epilogue_dtype: dtype for bias+ReLU / head multiply.  None = auto
            (bf16 on v6e/v7x, f32 on v5e).
    buffer_consts_once: request single buffering for the resident weights.

    Returns the value, shape (B, 1) float32.
    """
    w1, b1, w2, b2, w3, b3 = params
    B, S = x.shape
    H = w1.shape[0]
    if tile_b % 128 != 0:
        raise ValueError("tile_b must be a multiple of 128")
    ep = _default_epilogue_dtype() if epilogue_dtype is None else epilogue_dtype

    # Lane-dense batch tiles (multiples of 128); >= 2 grid steps whenever the
    # batch allows it so the "parallel" axis shards across both v7x TCs.
    Bp0 = _round_up(B, 128)
    if Bp0 <= 128:
        tb = 128
    else:
        tb = max(128, min(tile_b, _round_up(Bp0 // 2, 128)))
    Bp = _round_up(B, tb)
    if Bp != B:
        x = jnp.pad(x, ((0, Bp - B), (0, 0)))

    # Present the batch on the lane axis.  x (and W1) stay f32.
    xt = x.T                                                 # (S, Bp) f32
    w1f = w1.astype(jnp.float32)
    b1e = b1.astype(ep)
    w2c = w2.astype(compute_dtype)
    b2e = b2.astype(ep)
    w3e = w3.astype(ep)
    b3f = b3.astype(jnp.float32)

    grid = (Bp // tb,)
    c_item = jnp.finfo(compute_dtype).bits // 8
    e_item = jnp.finfo(ep).bits // 8
    cost = pl.CostEstimate(
        flops=2 * Bp * (S * H + H * H + H),
        transcendentals=0,
        bytes_accessed=(Bp * S * 4                 # x^T
                        + H * S * 4                # W1
                        + H * H * c_item           # W2
                        + (2 * H + H) * e_item + 4  # biases + head weight
                        + Bp * 4),                 # output
    )

    out = pl.pallas_call(
        functools.partial(_valuenet_kernel, ep_dtype=ep),
        out_shape=jax.ShapeDtypeStruct((1, Bp), jnp.float32),
        grid_spec=pltpu.PrefetchScalarGridSpec(
            num_scalar_prefetch=0,
            grid=grid,
            in_specs=[
                pl.BlockSpec((S, tb), lambda i: (0, i)),        # x^T tile
                _const_spec((H, S), buffer_consts_once),        # W1
                _const_spec((H, 1), buffer_consts_once),        # b1
                _const_spec((H, H), buffer_consts_once),        # W2
                _const_spec((H, 1), buffer_consts_once),        # b2
                _const_spec((H, 1), buffer_consts_once),        # w3 column
                _const_spec((1, 1), buffer_consts_once),        # b3
            ],
            out_specs=pl.BlockSpec((1, tb), lambda i: (0, i)),
        ),
        compiler_params=pltpu.CompilerParams(
            dimension_semantics=("parallel",)),
        cost_estimate=cost,
    )(xt, w1f, b1e, w2c, b2e, w3e, b3f)

    return out[0, :B][:, None]                                  # (B, 1)


def init_value_net_params(key, state_dim, hidden=256):
    """PyTorch-style uniform(+/- 1/sqrt(fan_in)) init, PyTorch-native layout."""
    ks = jax.random.split(key, 6)

    def lin(kw, kb, fan_in, fan_out):
        bound = 1.0 / jnp.sqrt(fan_in)
        w = jax.random.uniform(kw, (fan_out, fan_in), jnp.float32, -bound, bound)
        b = jax.random.uniform(kb, (fan_out, 1), jnp.float32, -bound, bound)
        return w, b

    w1, b1 = lin(ks[0], ks[1], state_dim, hidden)
    w2, b2 = lin(ks[2], ks[3], hidden, hidden)
    w3t, b3 = lin(ks[4], ks[5], hidden, 1)     # (1, H) / (1, 1)
    return (w1, b1, w2, b2, w3t.T, b3)         # head weight stored as (H, 1)


def value_net_reference(x, params):
    """Pure-JAX row-major reference (high-precision matmuls)."""
    w1, b1, w2, b2, w3, b3 = params
    hp = jax.lax.Precision.HIGHEST
    h1 = jnp.maximum(jnp.dot(x, w1.T, precision=hp) + b1[:, 0], 0.0)
    h2 = jnp.maximum(jnp.dot(h1, w2.T, precision=hp) + b2[:, 0], 0.0)
    return jnp.dot(h2, w3, precision=hp) + b3[0]


# TODO(synk): ValueNet.val() (torch.no_grad + .squeeze().cpu().item()) is a
# host-side convenience, not a kernel op; use float(value_net_forward(x)[0, 0]).

if __name__ == "__main__":
    key = jax.random.PRNGKey(0)
    k_param, k_x = jax.random.split(key)

    state_dim, hidden = 8, 256
    params = init_value_net_params(k_param, state_dim, hidden)

    x_small = jax.random.normal(k_x, (8, state_dim), dtype=jnp.float32)
    ref_small = value_net_reference(x_small, params)

    # Probe call (eager): if single-buffered constant BlockSpecs are not
    # supported by this Pallas version, fall back to default buffering.
    buf_once = True
    try:
        v_small = jax.block_until_ready(
            value_net_forward(x_small, params, buffer_consts_once=True))
    except Exception:
        buf_once = False
        v_small = jax.block_until_ready(
            value_net_forward(x_small, params, buffer_consts_once=False))

    assert v_small.shape == (8, 1)
    assert jnp.allclose(v_small, ref_small, atol=3e-2, rtol=3e-2)

    # Strict all-f32 path (v5e-style epilogue), tight tolerance.
    v_f32 = jax.block_until_ready(value_net_forward(
        x_small, params, compute_dtype=jnp.float32,
        epilogue_dtype=jnp.float32, buffer_consts_once=buf_once))
    assert v_f32.shape == (8, 1)
    assert jnp.allclose(v_f32, ref_small, atol=5e-3, rtol=5e-3)

    # Ragged batch under jit: pad + transpose fuse with the launch, and the
    # 300-row batch becomes a 2-step lane-dense grid (both v7x TensorCores,
    # multi-tile lane-dense output, default bf16 layer-2 path).
    fwd = jax.jit(lambda xx: value_net_forward(
        xx, params, buffer_consts_once=buf_once))
    x_big = jax.random.normal(jax.random.PRNGKey(1), (300, state_dim),
                              dtype=jnp.float32)
    v_big = jax.block_until_ready(fwd(x_big))
    ref_big = value_net_reference(x_big, params)
    assert v_big.shape == (300, 1)
    assert jnp.allclose(v_big, ref_big, atol=3e-2, rtol=3e-2)

    print("KERNEL_OK")
</pallas_src>

<mosaic_0001>
module attributes {stable_mosaic.version = 11 : i64} {
  func.func @_valuenet_kernel(%arg0: i32, %arg1: memref<8x128xf32, #tpu.memory_space<vmem>>, %arg2: memref<256x8xf32, #tpu.memory_space<vmem>>, %arg3: memref<256x1xf32, #tpu.memory_space<vmem>>, %arg4: memref<256x256xbf16, #tpu.memory_space<vmem>>, %arg5: memref<256x1xf32, #tpu.memory_space<vmem>>, %arg6: memref<256x1xf32, #tpu.memory_space<vmem>>, %arg7: memref<1x1xf32, #tpu.memory_space<vmem>>, %arg8: memref<1x128xf32, #tpu.memory_space<vmem>>) attributes {dimension_semantics = [#tpu.dimension_semantics<parallel>], iteration_bounds = array<i64: 1>, scalar_prefetch = 0 : i64, scratch_operands = 0 : i64, tpu.core_type = #tpu.core_type<tc>, window_params = [{transform_indices = @transform_0, window_bounds = array<i64: 8, 128>}, {pipeline_mode = #tpu.pipeline_mode<synchronous>, transform_indices = @transform_1, window_bounds = array<i64: 256, 8>}, {pipeline_mode = #tpu.pipeline_mode<synchronous>, transform_indices = @transform_2, window_bounds = array<i64: 256, 1>}, {pipeline_mode = #tpu.pipeline_mode<synchronous>, transform_indices = @transform_3, window_bounds = array<i64: 256, 256>}, {pipeline_mode = #tpu.pipeline_mode<synchronous>, transform_indices = @transform_4, window_bounds = array<i64: 256, 1>}, {pipeline_mode = #tpu.pipeline_mode<synchronous>, transform_indices = @transform_5, window_bounds = array<i64: 256, 1>}, {pipeline_mode = #tpu.pipeline_mode<synchronous>, transform_indices = @transform_6, window_bounds = array<i64: 1, 1>}, {transform_indices = @transform_7, window_bounds = array<i64: 1, 128>}]} {
    %c0 = arith.constant 0 : index
    %c0_0 = arith.constant 0 : index
    %0 = vector.load %arg1[%c0, %c0_0] : memref<8x128xf32, #tpu.memory_space<vmem>>, vector<8x128xf32>
    %c0_1 = arith.constant 0 : index
    %c0_2 = arith.constant 0 : index
    %1 = vector.load %arg2[%c0_1, %c0_2] : memref<256x8xf32, #tpu.memory_space<vmem>>, vector<256x8xf32>
    %cst = arith.constant dense<0.000000e+00> : vector<256x128xf32>
    %2 = tpu.matmul %1, %0, %cst {dimension_numbers = #tpu.dot_dimension_numbers<[1], [0], [0], [1], [0, 0, 1, 1], [], []>} : vector<256x8xf32>, vector<8x128xf32>, vector<256x128xf32> -> vector<256x128xf32>
    %c0_3 = arith.constant 0 : index
    %c0_4 = arith.constant 0 : index
    %3 = vector.load %arg3[%c0_3, %c0_4] : memref<256x1xf32, #tpu.memory_space<vmem>>, vector<256x1xf32>
    %4 = vector.broadcast %3 : vector<256x1xf32> to vector<256x128xf32>
    %5 = arith.addf %2, %4 : vector<256x128xf32>
    %cst_5 = arith.constant 0.000000e+00 : f32
    %6 = vector.broadcast %cst_5 : f32 to vector<256x128xf32>
    %7 = arith.maximumf %5, %6 : vector<256x128xf32>
    %c0_6 = arith.constant 0 : index
    %c0_7 = arith.constant 0 : index
    %8 = vector.load %arg4[%c0_6, %c0_7] : memref<256x256xbf16, #tpu.memory_space<vmem>>, vector<256x256xbf16>
    %9 = arith.truncf %7 : vector<256x128xf32> to vector<256x128xbf16>
    %cst_8 = arith.constant dense<0.000000e+00> : vector<256x128xf32>
    %10 = tpu.matmul %8, %9, %cst_8 {dimension_numbers = #tpu.dot_dimension_numbers<[1], [0], [0], [1], [0, 0, 1, 1], [], []>} : vector<256x256xbf16>, vector<256x128xbf16>, vector<256x128xf32> -> vector<256x128xf32>
    %c0_9 = arith.constant 0 : index
    %c0_10 = arith.constant 0 : index
    %11 = vector.load %arg5[%c0_9, %c0_10] : memref<256x1xf32, #tpu.memory_space<vmem>>, vector<256x1xf32>
    %12 = vector.broadcast %11 : vector<256x1xf32> to vector<256x128xf32>
    %13 = arith.addf %10, %12 : vector<256x128xf32>
    %cst_11 = arith.constant 0.000000e+00 : f32
    %14 = vector.broadcast %cst_11 : f32 to vector<256x128xf32>
    %15 = arith.maximumf %13, %14 : vector<256x128xf32>
    %c0_12 = arith.constant 0 : index
    %c0_13 = arith.constant 0 : index
    %16 = vector.load %arg6[%c0_12, %c0_13] : memref<256x1xf32, #tpu.memory_space<vmem>>, vector<256x1xf32>
    %17 = vector.broadcast %16 : vector<256x1xf32> to vector<256x128xf32>
    %18 = arith.mulf %15, %17 : vector<256x128xf32>
    %cst_14 = arith.constant dense<0.000000e+00> : vector<128xf32>
    %19 = vector.multi_reduction <add>, %18, %cst_14 [0] : vector<256x128xf32> to vector<128xf32>
    %20 = vector.shape_cast %19 : vector<128xf32> to vector<1x128xf32>
    %c0_15 = arith.constant 0 : index
    %c0_16 = arith.constant 0 : index
    %21 = vector.load %arg7[%c0_15, %c0_16] : memref<1x1xf32, #tpu.memory_space<vmem>>, vector<1x1xf32>
    %22 = vector.broadcast %21 : vector<1x1xf32> to vector<1x128xf32>
    %23 = arith.addf %20, %22 : vector<1x128xf32>
    %c0_17 = arith.constant 0 : index
    %c0_18 = arith.constant 0 : index
    %24 = vector.load %arg8[%c0_17, %c0_18] : memref<1x128xf32, #tpu.memory_space<vmem>>, vector<1x128xf32>
    tpu.vector_store %arg8[%c0_17, %c0_18], %23 {strides = array<i32>} : memref<1x128xf32, #tpu.memory_space<vmem>>, vector<1x128xf32>,
    return
  }
  func.func @transform_0(%arg0: i32) -> (i32, i32) {
    %c0_i32 = arith.constant 0 : i32
    %c0_i32_0 = arith.constant 0 : i32
    return %c0_i32, %arg0 : i32, i32
  }
  func.func @transform_1(%arg0: i32) -> (i32, i32) {
    %c0_i32 = arith.constant 0 : i32
    %c0_i32_0 = arith.constant 0 : i32
    %c0_i32_1 = arith.constant 0 : i32
    return %c0_i32, %c0_i32_0 : i32, i32
  }
  func.func @transform_2(%arg0: i32) -> (i32, i32) {
    %c0_i32 = arith.constant 0 : i32
    %c0_i32_0 = arith.constant 0 : i32
    %c0_i32_1 = arith.constant 0 : i32
    return %c0_i32, %c0_i32_0 : i32, i32
  }
  func.func @transform_3(%arg0: i32) -> (i32, i32) {
    %c0_i32 = arith.constant 0 : i32
    %c0_i32_0 = arith.constant 0 : i32
    %c0_i32_1 = arith.constant 0 : i32
    return %c0_i32, %c0_i32_0 : i32, i32
  }
  func.func @transform_4(%arg0: i32) -> (i32, i32) {
    %c0_i32 = arith.constant 0 : i32
    %c0_i32_0 = arith.constant 0 : i32
    %c0_i32_1 = arith.constant 0 : i32
    return %c0_i32, %c0_i32_0 : i32, i32
  }
  func.func @transform_5(%arg0: i32) -> (i32, i32) {
    %c0_i32 = arith.constant 0 : i32
    %c0_i32_0 = arith.constant 0 : i32
    %c0_i32_1 = arith.constant 0 : i32
    return %c0_i32, %c0_i32_0 : i32, i32
  }
  func.func @transform_6(%arg0: i32) -> (i32, i32) {
    %c0_i32 = arith.constant 0 : i32
    %c0_i32_0 = arith.constant 0 : i32
    %c0_i32_1 = arith.constant 0 : i32
    return %c0_i32, %c0_i32_0 : i32, i32
  }
  func.func @transform_7(%arg0: i32) -> (i32, i32) {
    %c0_i32 = arith.constant 0 : i32
    %c0_i32_0 = arith.constant 0 : i32
    return %c0_i32, %arg0 : i32, i32
  }
}

module attributes {stable_mosaic.version = 11 : i64} {
  func.func @_valuenet_kernel(%arg0: i32, %arg1: memref<8x128xf32, #tpu.memory_space<vmem>>, %arg2: memref<256x8xf32, #tpu.memory_space<vmem>>, %arg3: memref<256x1xf32, #tpu.memory_space<vmem>>, %arg4: memref<256x256xbf16, #tpu.memory_space<vmem>>, %arg5: memref<256x1xf32, #tpu.memory_space<vmem>>, %arg6: memref<256x1xf32, #tpu.memory_space<vmem>>, %arg7: memref<1x1xf32, #tpu.memory_space<vmem>>, %arg8: memref<1x128xf32, #tpu.memory_space<vmem>>) attributes {dimension_semantics = [#tpu.dimension_semantics<parallel>], iteration_bounds = array<i64: 1>, scalar_prefetch = 0 : i64, scratch_operands = 0 : i64, tpu.core_type = #tpu.core_type<tc>, window_params = [{transform_indices = @transform_0, window_bounds = array<i64: 8, 128>}, {pipeline_mode = #tpu.pipeline_mode<synchronous>, transform_indices = @transform_1, window_bounds = array<i64: 256, 8>}, {pipeline_mode = #tpu.pipeline_mode<synchronous>, transform_indices = @transform_2, window_bounds = array<i64: 256, 1>}, {pipeline_mode = #tpu.pipeline_mode<synchronous>, transform_indices = @transform_3, window_bounds = array<i64: 256, 256>}, {pipeline_mode = #tpu.pipeline_mode<synchronous>, transform_indices = @transform_4, window_bounds = array<i64: 256, 1>}, {pipeline_mode = #tpu.pipeline_mode<synchronous>, transform_indices = @transform_5, window_bounds = array<i64: 256, 1>}, {pipeline_mode = #tpu.pipeline_mode<synchronous>, transform_indices = @transform_6, window_bounds = array<i64: 1, 1>}, {transform_indices = @transform_7, window_bounds = array<i64: 1, 128>}]} {
    %c0 = arith.constant 0 : index
    %c0_0 = arith.constant 0 : index
    %0 = vector.load %arg1[%c0, %c0_0] : memref<8x128xf32, #tpu.memory_space<vmem>>, vector<8x128xf32>
    %c0_1 = arith.constant 0 : index
    %c0_2 = arith.constant 0 : index
    %1 = vector.load %arg2[%c0_1, %c0_2] : memref<256x8xf32, #tpu.memory_space<vmem>>, vector<256x8xf32>
    %cst = arith.constant dense<0.000000e+00> : vector<256x128xf32>
    %2 = tpu.matmul %1, %0, %cst {dimension_numbers = #tpu.dot_dimension_numbers<[1], [0], [0], [1], [0, 0, 1, 1], [], []>} : vector<256x8xf32>, vector<8x128xf32>, vector<256x128xf32> -> vector<256x128xf32>
    %c0_3 = arith.constant 0 : index
    %c0_4 = arith.constant 0 : index
    %3 = vector.load %arg3[%c0_3, %c0_4] : memref<256x1xf32, #tpu.memory_space<vmem>>, vector<256x1xf32>
    %4 = vector.broadcast %3 : vector<256x1xf32> to vector<256x128xf32>
    %5 = arith.addf %2, %4 : vector<256x128xf32>
    %cst_5 = arith.constant 0.000000e+00 : f32
    %6 = vector.broadcast %cst_5 : f32 to vector<256x128xf32>
    %7 = arith.maximumf %5, %6 : vector<256x128xf32>
    %c0_6 = arith.constant 0 : index
    %c0_7 = arith.constant 0 : index
    %8 = vector.load %arg4[%c0_6, %c0_7] : memref<256x256xbf16, #tpu.memory_space<vmem>>, vector<256x256xbf16>
    %9 = arith.truncf %7 : vector<256x128xf32> to vector<256x128xbf16>
    %cst_8 = arith.constant dense<0.000000e+00> : vector<256x128xf32>
    %10 = tpu.matmul %8, %9, %cst_8 {dimension_numbers = #tpu.dot_dimension_numbers<[1], [0], [0], [1], [0, 0, 1, 1], [], []>} : vector<256x256xbf16>, vector<256x128xbf16>, vector<256x128xf32> -> vector<256x128xf32>
    %c0_9 = arith.constant 0 : index
    %c0_10 = arith.constant 0 : index
    %11 = vector.load %arg5[%c0_9, %c0_10] : memref<256x1xf32, #tpu.memory_space<vmem>>, vector<256x1xf32>
    %12 = vector.broadcast %11 : vector<256x1xf32> to vector<256x128xf32>
    %13 = arith.addf %10, %12 : vector<256x128xf32>
    %cst_11 = arith.constant 0.000000e+00 : f32
    %14 = vector.broadcast %cst_11 : f32 to vector<256x128xf32>
    %15 = arith.maximumf %13, %14 : vector<256x128xf32>
    %c0_12 = arith.constant 0 : index
    %c0_13 = arith.constant 0 : index
    %16 = vector.load %arg6[%c0_12, %c0_13] : memref<256x1xf32, #tpu.memory_space<vmem>>, vector<256x1xf32>
    %17 = vector.broadcast %16 : vector<256x1xf32> to vector<256x128xf32>
    %18 = arith.mulf %15, %17 : vector<256x128xf32>
    %cst_14 = arith.constant dense<0.000000e+00> : vector<128xf32>
    %19 = vector.multi_reduction <add>, %18, %cst_14 [0] : vector<256x128xf32> to vector<128xf32>
    %20 = vector.shape_cast %19 : vector<128xf32> to vector<1x128xf32>
    %c0_15 = arith.constant 0 : index
    %c0_16 = arith.constant 0 : index
    %21 = vector.load %arg7[%c0_15, %c0_16] : memref<1x1xf32, #tpu.memory_space<vmem>>, vector<1x1xf32>
    %22 = vector.broadcast %21 : vector<1x1xf32> to vector<1x128xf32>
    %23 = arith.addf %20, %22 : vector<1x128xf32>
    %c0_17 = arith.constant 0 : index
    %c0_18 = arith.constant 0 : index
    %24 = vector.load %arg8[%c0_17, %c0_18] : memref<1x128xf32, #tpu.memory_space<vmem>>, vector<1x128xf32>
    tpu.vector_store %arg8[%c0_17, %c0_18], %23 {strides = array<i32>} : memref<1x128xf32, #tpu.memory_space<vmem>>, vector<1x128xf32>,
    return
  }
  func.func @transform_0(%arg0: i32) -> (i32, i32) {
    %c0_i32 = arith.constant 0 : i32
    %c0_i32_0 = arith.constant 0 : i32
    return %c0_i32, %arg0 : i32, i32
  }
  func.func @transform_1(%arg0: i32) -> (i32, i32) {
    %c0_i32 = arith.constant 0 : i32
    %c0_i32_0 = arith.constant 0 : i32
    %c0_i32_1 = arith.constant 0 : i32
    return %c0_i32, %c0_i32_0 : i32, i32
  }
  func.func @transform_2(%arg0: i32) -> (i32, i32) {
    %c0_i32 = arith.constant 0 : i32
    %c0_i32_0 = arith.constant 0 : i32
    %c0_i32_1 = arith.constant 0 : i32
    return %c0_i32, %c0_i32_0 : i32, i32
  }
  func.func @transform_3(%arg0: i32) -> (i32, i32) {
    %c0_i32 = arith.constant 0 : i32
    %c0_i32_0 = arith.constant 0 : i32
    %c0_i32_1 = arith.constant 0 : i32
    return %c0_i32, %c0_i32_0 : i32, i32
  }
  func.func @transform_4(%arg0: i32) -> (i32, i32) {
    %c0_i32 = arith.constant 0 : i32
    %c0_i32_0 = arith.constant 0 : i32
    %c0_i32_1 = arith.constant 0 : i32
    return %c0_i32, %c0_i32_0 : i32, i32
  }
  func.func @transform_5(%arg0: i32) -> (i32, i32) {
    %c0_i32 = arith.constant 0 : i32
    %c0_i32_0 = arith.constant 0 : i32
    %c0_i32_1 = arith.constant 0 : i32
    return %c0_i32, %c0_i32_0 : i32, i32
  }
  func.func @transform_6(%arg0: i32) -> (i32, i32) {
    %c0_i32 = arith.constant 0 : i32
    %c0_i32_0 = arith.constant 0 : i32
    %c0_i32_1 = arith.constant 0 : i32
    return %c0_i32, %c0_i32_0 : i32, i32
  }
  func.func @transform_7(%arg0: i32) -> (i32, i32) {
    %c0_i32 = arith.constant 0 : i32
    %c0_i32_0 = arith.constant 0 : i32
    return %c0_i32, %arg0 : i32, i32
  }
}

</mosaic_0001>

<llo_original>
// kernel: tpu_custom_call.1
$region0: #{tpu_custom_call.1}
  #allocation0 [shape = 'u32[]', space=smem, size = 0x4, offset = 0x4, fixed_abs, tag = 'smem constant byte address 0x4 - core index']
  #allocation1 [shape = 'u32[144,128]{1,0:T(1,128)}', space=vmem, size = 0x12000, scoped, tag = 'internal scratch']
  #allocation2 [shape = 'f32[1,1]{1,0:T(1,128)S(1)}', space=vmem, size = 0x200, scoped, tag = 'scoped memory for tpu_custom_call.1']
  %s0 = inlined_call_operand.vmem [shape: f32[8,128], index: 0, kind: input, shape index: {}]
  %s1 = inlined_call_operand.vmem [shape: f32[256,8], index: 1, kind: input, shape index: {}]
  %s2 = inlined_call_operand.vmem [shape: f32[256,1], index: 2, kind: input, shape index: {}]
  %s3 = inlined_call_operand.vmem [shape: bf16[256,256], index: 3, kind: input, shape index: {}]
  %s4 = inlined_call_operand.vmem [shape: f32[256,1], index: 4, kind: input, shape index: {}]
  %s5 = inlined_call_operand.vmem [shape: f32[256,1], index: 5, kind: input, shape index: {}]
  %s6 = inlined_call_operand.<no memory space> [shape: f32[1,1], index: 6, kind: input, shape index: {}]
  %s7 = inlined_call_operand.hbm [shape: f32[1,128], index: 7, kind: output, shape index: {}]
  %s8 = sld [smem:[#allocation0]]
  $region38: #{tpu_custom_call.1} parent=0
    _
  %s10 = ssub.s32 1, %s8
  %s11 = scalar_select 0, %s10, %s8
  %v12 = vstv %s6
  %13 = vst [vmem:[#allocation2] sm:$0x1] %v12
  $region1: #{tpu_custom_call.1} parent=0
    #allocation3 [shape = 'u8[512]{0}', space=vmem, size = 0x400, scoped, tag = 'output window, operand 0, single buffered']
    #allocation4 [shape = 's32[1]{0}', space=sflag, size = 0x4, scoped, tag = 'scoped memory for tpu_custom_call.1']
    %14 = vsyncpa [#allocation4], 0
    // Predicated region
    $region2: #{tpu_custom_call.1} parent=1 // pred_check
      _
    $region3: #{tpu_custom_call.1} parent=1 // pred_check_branch
      %16 = sbr.rel (0) target = $region5
    $region4: #{tpu_custom_call.1} parent=1 // pred_region
      _
    $region5: #{tpu_custom_call.1} parent=1 // pred_fallthru
      _
    // Predicated region
    $region6: #{tpu_custom_call.1} parent=1 // pred_check
      _
    $region7: #{tpu_custom_call.1} parent=1 // pred_check_branch
      %18 = sbr.rel (0) target = $region9
    $region8: #{tpu_custom_call.1} parent=1 // pred_region
      _
    $region9: #{tpu_custom_call.1} parent=1 // pred_fallthru
      _
    // Predicated region
    $region10: #{tpu_custom_call.1} parent=1 // pred_check
      _
    $region11: #{tpu_custom_call.1} parent=1 // pred_check_branch
      %20 = sbr.rel (0) target = $region13
    $region12: #{tpu_custom_call.1} parent=1 // pred_region
      _
    $region13: #{tpu_custom_call.1} parent=1 // pred_fallthru
      _
    // Predicated region
    $region14: #{tpu_custom_call.1} parent=1 // pred_check
      _
    $region15: #{tpu_custom_call.1} parent=1 // pred_check_branch
      %22 = sbr.rel (0) target = $region17
    $region16: #{tpu_custom_call.1} parent=1 // pred_region
      _
    $region17: #{tpu_custom_call.1} parent=1 // pred_fallthru
      _
    // Predicated region
    $region18: #{tpu_custom_call.1} parent=1 // pred_check
      _
    $region19: #{tpu_custom_call.1} parent=1 // pred_check_branch
      %24 = sbr.rel (0) target = $region21
    $region20: #{tpu_custom_call.1} parent=1 // pred_region
      _
    $region21: #{tpu_custom_call.1} parent=1 // pred_fallthru
      _
    // Predicated region
    $region22: #{tpu_custom_call.1} parent=1 // pred_check
      _
    $region23: #{tpu_custom_call.1} parent=1 // pred_check_branch
      %26 = sbr.rel (0) target = $region25
    $region24: #{tpu_custom_call.1} parent=1 // pred_region
      _
    $region25: #{tpu_custom_call.1} parent=1 // pred_fallthru
      _
    // Predicated region
    $region26: #{tpu_custom_call.1} parent=1 // pred_check
      _
    $region27: #{tpu_custom_call.1} parent=1 // pred_check_branch
      %28 = sbr.rel (0) target = $region29
    $region28: #{tpu_custom_call.1} parent=1 // pred_region
      _
    $region29: #{tpu_custom_call.1} parent=1 // pred_fallthru
      _
    %v30 = vld [vmem:[%s0] sm:$0xff]
    %v31 = vld [vmem:[%s1] sm:$0xff]
    %v32 = vld [vmem:[%s1 + $0x8] sm:$0xff]
    %v33 = vld [vmem:[%s1 + $0x10] sm:$0xff]
    %v34 = vld [vmem:[%s1 + $0x18] sm:$0xff]
    %v35 = vld [vmem:[%s1 + $0x20] sm:$0xff]
    %v36 = vld [vmem:[%s1 + $0x28] sm:$0xff]
    %v37 = vld [vmem:[%s1 + $0x30] sm:$0xff]
    %v38 = vld [vmem:[%s1 + $0x38] sm:$0xff]
    %v39 = vld [vmem:[%s1 + $0x40] sm:$0xff]
    %v40 = vld [vmem:[%s1 + $0x48] sm:$0xff]
    %v41 = vld [vmem:[%s1 + $0x50] sm:$0xff]
    %v42 = vld [vmem:[%s1 + $0x58] sm:$0xff]
    %v43 = vld [vmem:[%s1 + $0x60] sm:$0xff]
    %v44 = vld [vmem:[%s1 + $0x68] sm:$0xff]
    %v45 = vld [vmem:[%s1 + $0x70] sm:$0xff]
    %v46 = vld [vmem:[%s1 + $0x78] sm:$0xff]
    %v47 = vld [vmem:[%s1 + $0x80] sm:$0xff]
    %v48 = vld [vmem:[%s1 + $0x88] sm:$0xff]
    %v49 = vld [vmem:[%s1 + $0x90] sm:$0xff]
    %v50 = vld [vmem:[%s1 + $0x98] sm:$0xff]
    %v51 = vld [vmem:[%s1 + $0xa0] sm:$0xff]
    %v52 = vld [vmem:[%s1 + $0xa8] sm:$0xff]
    %v53 = vld [vmem:[%s1 + $0xb0] sm:$0xff]
    %v54 = vld [vmem:[%s1 + $0xb8] sm:$0xff]
    %v55 = vld [vmem:[%s1 + $0xc0] sm:$0xff]
    %v56 = vld [vmem:[%s1 + $0xc8] sm:$0xff]
    %v57 = vld [vmem:[%s1 + $0xd0] sm:$0xff]
    %v58 = vld [vmem:[%s1 + $0xd8] sm:$0xff]
    %v59 = vld [vmem:[%s1 + $0xe0] sm:$0xff]
    %v60 = vld [vmem:[%s1 + $0xe8] sm:$0xff]
    %v61 = vld [vmem:[%s1 + $0xf0] sm:$0xff]
    %v62 = vld [vmem:[%s1 + $0xf8] sm:$0xff]
    %v63 = vld [vmem:[%s2] sm:$0xff]
    %v64 = vld [vmem:[%s2 + $0x8] sm:$0xff]
    %v65 = vld [vmem:[%s2 + $0x10] sm:$0xff]
    %v66 = vld [vmem:[%s2 + $0x18] sm:$0xff]
    %v67 = vld [vmem:[%s2 + $0x20] sm:$0xff]
    %v68 = vld [vmem:[%s2 + $0x28] sm:$0xff]
    %v69 = vld [vmem:[%s2 + $0x30] sm:$0xff]
    %v70 = vld [vmem:[%s2 + $0x38] sm:$0xff]
    %v71 = vld [vmem:[%s2 + $0x40] sm:$0xff]
    %v72 = vld [vmem:[%s2 + $0x48] sm:$0xff]
    %v73 = vld [vmem:[%s2 + $0x50] sm:$0xff]
    %v74 = vld [vmem:[%s2 + $0x58] sm:$0xff]
    %v75 = vld [vmem:[%s2 + $0x60] sm:$0xff]
    %v76 = vld [vmem:[%s2 + $0x68] sm:$0xff]
    %v77 = vld [vmem:[%s2 + $0x70] sm:$0xff]
    %v78 = vld [vmem:[%s2 + $0x78] sm:$0xff]
    %v79 = vld [vmem:[%s2 + $0x80] sm:$0xff]
    %v80 = vld [vmem:[%s2 + $0x88] sm:$0xff]
    %v81 = vld [vmem:[%s2 + $0x90] sm:$0xff]
    %v82 = vld [vmem:[%s2 + $0x98] sm:$0xff]
    %v83 = vld [vmem:[%s2 + $0xa0] sm:$0xff]
    %v84 = vld [vmem:[%s2 + $0xa8] sm:$0xff]
    %v85 = vld [vmem:[%s2 + $0xb0] sm:$0xff]
    %v86 = vld [vmem:[%s2 + $0xb8] sm:$0xff]
    %v87 = vld [vmem:[%s2 + $0xc0] sm:$0xff]
    %v88 = vld [vmem:[%s2 + $0xc8] sm:$0xff]
    %v89 = vld [vmem:[%s2 + $0xd0] sm:$0xff]
    %v90 = vld [vmem:[%s2 + $0xd8] sm:$0xff]
    %v91 = vld [vmem:[%s2 + $0xe0] sm:$0xff]
    %v92 = vld [vmem:[%s2 + $0xe8] sm:$0xff]
    %v93 = vld [vmem:[%s2 + $0xf0] sm:$0xff]
    %v94 = vld [vmem:[%s2 + $0xf8] sm:$0xff]
    %96 = vset.pattern.permute.xlu0 0
    %97 = vperm.xlu0 %96, %v63
    %v98 = vpop.permute.xlu0 %97
    %101 = vset.pattern.permute.xlu0 0
    %102 = vperm.xlu0 %101, %v64
    %v103 = vpop.permute.xlu0 %102
    %106 = vset.pattern.permute.xlu0 0
    %107 = vperm.xlu0 %106, %v65
    %v108 = vpop.permute.xlu0 %107
    %111 = vset.pattern.permute.xlu0 0
    %112 = vperm.xlu0 %111, %v66
    %v113 = vpop.permute.xlu0 %112
    %116 = vset.pattern.permute.xlu0 0
    %117 = vperm.xlu0 %116, %v67
    %v118 = vpop.permute.xlu0 %117
    %121 = vset.pattern.permute.xlu0 0
    %122 = vperm.xlu0 %121, %v68
    %v123 = vpop.permute.xlu0 %122
    %126 = vset.pattern.permute.xlu0 0
    %127 = vperm.xlu0 %126, %v69
    %v128 = vpop.permute.xlu0 %127
    %131 = vset.pattern.permute.xlu0 0
    %132 = vperm.xlu0 %131, %v70
    %v133 = vpop.permute.xlu0 %132
    %136 = vset.pattern.permute.xlu0 0
    %137 = vperm.xlu0 %136, %v71
    %v138 = vpop.permute.xlu0 %137
    %141 = vset.pattern.permute.xlu0 0
    %142 = vperm.xlu0 %141, %v72
    %v143 = vpop.permute.xlu0 %142
    %146 = vset.pattern.permute.xlu0 0
    %147 = vperm.xlu0 %146, %v73
    %v148 = vpop.permute.xlu0 %147
    %151 = vset.pattern.permute.xlu0 0
    %152 = vperm.xlu0 %151, %v74
    %v153 = vpop.permute.xlu0 %152
    %156 = vset.pattern.permute.xlu0 0
    %157 = vperm.xlu0 %156, %v75
    %v158 = vpop.permute.xlu0 %157
    %161 = vset.pattern.permute.xlu0 0
    %162 = vperm.xlu0 %161, %v76
    %v163 = vpop.permute.xlu0 %162
    %166 = vset.pattern.permute.xlu0 0
    %167 = vperm.xlu0 %166, %v77
    %v168 = vpop.permute.xlu0 %167
    %171 = vset.pattern.permute.xlu0 0
    %172 = vperm.xlu0 %171, %v78
    %v173 = vpop.permute.xlu0 %172
    %176 = vset.pattern.permute.xlu0 0
    %177 = vperm.xlu0 %176, %v79
    %v178 = vpop.permute.xlu0 %177
    %181 = vset.pattern.permute.xlu0 0
    %182 = vperm.xlu0 %181, %v80
    %v183 = vpop.permute.xlu0 %182
    %186 = vset.pattern.permute.xlu0 0
    %187 = vperm.xlu0 %186, %v81
    %v188 = vpop.permute.xlu0 %187
    %191 = vset.pattern.permute.xlu0 0
    %192 = vperm.xlu0 %191, %v82
    %v193 = vpop.permute.xlu0 %192
    %196 = vset.pattern.permute.xlu0 0
    %197 = vperm.xlu0 %196, %v83
    %v198 = vpop.permute.xlu0 %197
    %201 = vset.pattern.permute.xlu0 0
    %202 = vperm.xlu0 %201, %v84
    %v203 = vpop.permute.xlu0 %202
    %206 = vset.pattern.permute.xlu0 0
    %207 = vperm.xlu0 %206, %v85
    %v208 = vpop.permute.xlu0 %207
    %211 = vset.pattern.permute.xlu0 0
    %212 = vperm.xlu0 %211, %v86
    %v213 = vpop.permute.xlu0 %212
    %216 = vset.pattern.permute.xlu0 0
    %217 = vperm.xlu0 %216, %v87
    %v218 = vpop.permute.xlu0 %217
    %221 = vset.pattern.permute.xlu0 0
    %222 = vperm.xlu0 %221, %v88
    %v223 = vpop.permute.xlu0 %222
    %226 = vset.pattern.permute.xlu0 0
    %227 = vperm.xlu0 %226, %v89
    %v228 = vpop.permute.xlu0 %227
    %231 = vset.pattern.permute.xlu0 0
    %232 = vperm.xlu0 %231, %v90
    %v233 = vpop.permute.xlu0 %232
    %236 = vset.pattern.permute.xlu0 0
    %237 = vperm.xlu0 %236, %v91
    %v238 = vpop.permute.xlu0 %237
    %241 = vset.pattern.permute.xlu0 0
    %242 = vperm.xlu0 %241, %v92
    %v243 = vpop.permute.xlu0 %242
    %246 = vset.pattern.permute.xlu0 0
    %247 = vperm.xlu0 %246, %v93
    %v248 = vpop.permute.xlu0 %247
    %251 = vset.pattern.permute.xlu0 0
    %252 = vperm.xlu0 %251, %v94
    %v253 = vpop.permute.xlu0 %252
    %vm255 = vcmask 64512
    %v257 = vsel %vm255, %v31, 0
    %v260 = vsel %vm255, %v32, 0
    %v263 = vsel %vm255, %v33, 0
    %v266 = vsel %vm255, %v34, 0
    %v269 = vsel %vm255, %v35, 0
    %v272 = vsel %vm255, %v36, 0
    %v275 = vsel %vm255, %v37, 0
    %v278 = vsel %vm255, %v38, 0
    %v281 = vsel %vm255, %v39, 0
    %v284 = vsel %vm255, %v40, 0
    %v287 = vsel %vm255, %v41, 0
    %v290 = vsel %vm255, %v42, 0
    %v293 = vsel %vm255, %v43, 0
    %v296 = vsel %vm255, %v44, 0
    %v299 = vsel %vm255, %v45, 0
    %v302 = vsel %vm255, %v46, 0
    %v305 = vsel %vm255, %v47, 0
    %v308 = vsel %vm255, %v48, 0
    %v311 = vsel %vm255, %v49, 0
    %v314 = vsel %vm255, %v50, 0
    %v317 = vsel %vm255, %v51, 0
    %v320 = vsel %vm255, %v52, 0
    %v323 = vsel %vm255, %v53, 0
    %v326 = vsel %vm255, %v54, 0
    %v329 = vsel %vm255, %v55, 0
    %v332 = vsel %vm255, %v56, 0
    %v335 = vsel %vm255, %v57, 0
    %v338 = vsel %vm255, %v58, 0
    %v341 = vsel %vm255, %v59, 0
    %v344 = vsel %vm255, %v60, 0
    %v347 = vsel %vm255, %v61, 0
    %v350 = vsel %vm255, %v62, 0
    %352 = vmatprep.subr.mxu0 0.0
    %353 = vmatpush1.msra.mxu0 %v30
    %354 = vmatprep.subr.mxu0 0.0
    %355 = vmatpush1.msra.mxu0 0.0
    %356 = vmatprep.subr.mxu0 0.0
    %357 = vmatpush1.msra.mxu0 0.0
    %358 = vmatprep.subr.mxu0 0.0
    %359 = vmatpush1.msra.mxu0 0.0
    %360 = vmatprep.subr.mxu0 0.0
    %361 = vmatpush1.msra.mxu0 0.0
    %362 = vmatprep.subr.mxu0 0.0
    %363 = vmatpush1.msra.mxu0 0.0
    %364 = vmatprep.subr.mxu0 0.0
    %365 = vmatpush1.msra.mxu0 0.0
    %366 = vmatprep.subr.mxu0 0.0
    %367 = vmatpush1.msra.mxu0 0.0
    %368 = vmatprep.subr.mxu0 0.0
    %369 = vmatpush1.msra.mxu0 0.0
    %370 = vmatprep.subr.mxu0 0.0
    %371 = vmatpush1.msra.mxu0 0.0
    %372 = vmatprep.subr.mxu0 0.0
    %373 = vmatpush1.msra.mxu0 0.0
    %374 = vmatprep.subr.mxu0 0.0
    %375 = vmatpush1.msra.mxu0 0.0
    %376 = vmatprep.subr.mxu0 0.0
    %377 = vmatpush1.msra.mxu0 0.0
    %378 = vmatprep.subr.mxu0 0.0
    %379 = vmatpush1.msra.mxu0 0.0
    %380 = vmatprep.subr.mxu0 0.0
    %381 = vmatpush1.msra.mxu0 0.0
    %382 = vmatprep.subr.mxu0 0.0
    %383 = vmatpush1.msra.mxu0 0.0
    %384 = vmatprep.subr.mxu0 0.0
    %385 = vmatpush1.msra.mxu0 0.0
    %386 = vmatprep.subr.mxu0 0.0
    %387 = vmatpush1.msra.mxu0 0.0
    %388 = vmatprep.subr.mxu0 0.0
    %389 = vmatpush1.msra.mxu0 0.0
    %390 = vmatprep.subr.mxu0 0.0
    %391 = vmatpush1.msra.mxu0 0.0
    %392 = vmatprep.subr.mxu0 0.0
    %393 = vmatpush1.msra.mxu0 0.0
    %394 = vmatprep.subr.mxu0 0.0
    %395 = vmatpush1.msra.mxu0 0.0
    %396 = vmatprep.subr.mxu0 0.0
    %397 = vmatpush1.msra.mxu0 0.0
    %398 = vmatprep.subr.mxu0 0.0
    %399 = vmatpush1.msra.mxu0 0.0
    %400 = vmatprep.subr.mxu0 0.0
    %401 = vmatpush1.msra.mxu0 0.0
    %402 = vmatprep.subr.mxu0 0.0
    %403 = vmatpush1.msra.mxu0 0.0
    %404 = vmatprep.subr.mxu0 0.0
    %405 = vmatpush1.msra.mxu0 0.0
    %406 = vmatprep.subr.mxu0 0.0
    %407 = vmatpush1.msra.mxu0 0.0
    %408 = vmatprep.subr.mxu0 0.0
    %409 = vmatpush1.msra.mxu0 0.0
    %410 = vmatprep.subr.mxu0 0.0
    %411 = vmatpush1.msra.mxu0 0.0
    %412 = vmatprep.subr.mxu0 0.0
    %413 = vmatpush1.msra.mxu0 0.0
    %414 = vmatprep.subr.mxu0 0.0
    %415 = vmatpush1.msra.mxu0 0.0
    %416 = vmatprep.mubr.f32.mxu0 0.0
    %417 = vmatmul.mubr.f32.gmra.mrb[0].mxu0 %v257
    %v418 = vpop.f32.mrb[0].mxu0
    %v419 = vadd.f32 %v98, %v418
    %v420 = vpop.f32.mrb[0].mxu0
    %421 = vmatprep.mubr.f32.mxu0 0.0
    %422 = vmatmul.mubr.f32.gmra.mrb[0].mxu0 %v260
    %v423 = vpop.f32.mrb[0].mxu0
    %v424 = vadd.f32 %v103, %v423
    %v425 = vpop.f32.mrb[0].mxu0
    %426 = vmatprep.mubr.f32.mxu0 0.0
    %427 = vmatmul.mubr.f32.gmra.mrb[0].mxu0 %v263
    %v428 = vpop.f32.mrb[0].mxu0
    %v429 = vadd.f32 %v108, %v428
    %v430 = vpop.f32.mrb[0].mxu0
    %431 = vmatprep.mubr.f32.mxu0 0.0
    %432 = vmatmul.mubr.f32.gmra.mrb[0].mxu0 %v266
    %v433 = vpop.f32.mrb[0].mxu0
    %v434 = vadd.f32 %v113, %v433
    %v435 = vpop.f32.mrb[0].mxu0
    %436 = vmatprep.mubr.f32.mxu0 0.0
    %437 = vmatmul.mubr.f32.gmra.mrb[0].mxu0 %v269
    %v438 = vpop.f32.mrb[0].mxu0
    %v439 = vadd.f32 %v118, %v438
    %v440 = vpop.f32.mrb[0].mxu0
    %441 = vmatprep.mubr.f32.mxu0 0.0
    %442 = vmatmul.mubr.f32.gmra.mrb[0].mxu0 %v272
    %v443 = vpop.f32.mrb[0].mxu0
    %v444 = vadd.f32 %v123, %v443
    %v445 = vpop.f32.mrb[0].mxu0
    %446 = vmatprep.mubr.f32.mxu0 0.0
    %447 = vmatmul.mubr.f32.gmra.mrb[0].mxu0 %v275
    %v448 = vpop.f32.mrb[0].mxu0
    %v449 = vadd.f32 %v128, %v448
    %v450 = vpop.f32.mrb[0].mxu0
    %451 = vmatprep.mubr.f32.mxu0 0.0
    %452 = vmatmul.mubr.f32.gmra.mrb[0].mxu0 %v278
    %v453 = vpop.f32.mrb[0].mxu0
    %v454 = vadd.f32 %v133, %v453
    %v455 = vpop.f32.mrb[0].mxu0
    %456 = vmatprep.mubr.f32.mxu0 0.0
    %457 = vmatmul.mubr.f32.gmra.mrb[0].mxu0 %v281
    %v458 = vpop.f32.mrb[0].mxu0
    %v459 = vadd.f32 %v138, %v458
    %v460 = vpop.f32.mrb[0].mxu0
    %461 = vmatprep.mubr.f32.mxu0 0.0
    %462 = vmatmul.mubr.f32.gmra.mrb[0].mxu0 %v284
    %v463 = vpop.f32.mrb[0].mxu0
    %v464 = vadd.f32 %v143, %v463
    %v465 = vpop.f32.mrb[0].mxu0
    %466 = vmatprep.mubr.f32.mxu0 0.0
    %467 = vmatmul.mubr.f32.gmra.mrb[0].mxu0 %v287
    %v468 = vpop.f32.mrb[0].mxu0
    %v469 = vadd.f32 %v148, %v468
    %v470 = vpop.f32.mrb[0].mxu0
    %471 = vmatprep.mubr.f32.mxu0 0.0
    %472 = vmatmul.mubr.f32.gmra.mrb[0].mxu0 %v290
    %v473 = vpop.f32.mrb[0].mxu0
    %v474 = vadd.f32 %v153, %v473
    %v475 = vpop.f32.mrb[0].mxu0
    %476 = vmatprep.mubr.f32.mxu0 0.0
    %477 = vmatmul.mubr.f32.gmra.mrb[0].mxu0 %v293
    %v478 = vpop.f32.mrb[0].mxu0
    %v479 = vadd.f32 %v158, %v478
    %v480 = vpop.f32.mrb[0].mxu0
    %481 = vmatprep.mubr.f32.mxu0 0.0
    %482 = vmatmul.mubr.f32.gmra.mrb[0].mxu0 %v296
    %v483 = vpop.f32.mrb[0].mxu0
    %v484 = vadd.f32 %v163, %v483
    %v485 = vpop.f32.mrb[0].mxu0
    %486 = vmatprep.mubr.f32.mxu0 0.0
    %487 = vmatmul.mubr.f32.gmra.mrb[0].mxu0 %v299
    %v488 = vpop.f32.mrb[0].mxu0
    %v489 = vadd.f32 %v168, %v488
    %v490 = vpop.f32.mrb[0].mxu0
    %491 = vmatprep.mubr.f32.mxu0 0.0
    %492 = vmatmul.mubr.f32.gmra.mrb[0].mxu0 %v302
    %v493 = vpop.f32.mrb[0].mxu0
    %v494 = vadd.f32 %v173, %v493
    %v495 = vpop.f32.mrb[0].mxu0
    %496 = vmatprep.mubr.f32.mxu0 0.0
    %497 = vmatmul.mubr.f32.gmra.mrb[0].mxu0 %v305
    %v498 = vpop.f32.mrb[0].mxu0
    %v499 = vadd.f32 %v178, %v498
    %v500 = vpop.f32.mrb[0].mxu0
    %501 = vmatprep.mubr.f32.mxu0 0.0
    %502 = vmatmul.mubr.f32.gmra.mrb[0].mxu0 %v308
    %v503 = vpop.f32.mrb[0].mxu0
    %v504 = vadd.f32 %v183, %v503
    %v505 = vpop.f32.mrb[0].mxu0
    %506 = vmatprep.mubr.f32.mxu0 0.0
    %507 = vmatmul.mubr.f32.gmra.mrb[0].mxu0 %v311
    %v508 = vpop.f32.mrb[0].mxu0
    %v509 = vadd.f32 %v188, %v508
    %v510 = vpop.f32.mrb[0].mxu0
    %511 = vmatprep.mubr.f32.mxu0 0.0
    %512 = vmatmul.mubr.f32.gmra.mrb[0].mxu0 %v314
    %v513 = vpop.f32.mrb[0].mxu0
    %v514 = vadd.f32 %v193, %v513
    %v515 = vpop.f32.mrb[0].mxu0
    %516 = vmatprep.mubr.f32.mxu0 0.0
    %517 = vmatmul.mubr.f32.gmra.mrb[0].mxu0 %v317
    %v518 = vpop.f32.mrb[0].mxu0
    %v519 = vadd.f32 %v198, %v518
    %v520 = vpop.f32.mrb[0].mxu0
    %521 = vmatprep.mubr.f32.mxu0 0.0
    %522 = vmatmul.mubr.f32.gmra.mrb[0].mxu0 %v320
    %v523 = vpop.f32.mrb[0].mxu0
    %v524 = vadd.f32 %v203, %v523
    %v525 = vpop.f32.mrb[0].mxu0
    %526 = vmatprep.mubr.f32.mxu0 0.0
    %527 = vmatmul.mubr.f32.gmra.mrb[0].mxu0 %v323
    %v528 = vpop.f32.mrb[0].mxu0
    %v529 = vadd.f32 %v208, %v528
    %v530 = vpop.f32.mrb[0].mxu0
    %531 = vmatprep.mubr.f32.mxu0 0.0
    %532 = vmatmul.mubr.f32.gmra.mrb[0].mxu0 %v326
    %v533 = vpop.f32.mrb[0].mxu0
    %v534 = vadd.f32 %v213, %v533
    %v535 = vpop.f32.mrb[0].mxu0
    %536 = vmatprep.mubr.f32.mxu0 0.0
    %537 = vmatmul.mubr.f32.gmra.mrb[0].mxu0 %v329
    %v538 = vpop.f32.mrb[0].mxu0
    %v539 = vadd.f32 %v218, %v538
    %v540 = vpop.f32.mrb[0].mxu0
    %541 = vmatprep.mubr.f32.mxu0 0.0
    %542 = vmatmul.mubr.f32.gmra.mrb[0].mxu0 %v332
    %v543 = vpop.f32.mrb[0].mxu0
    %v544 = vadd.f32 %v223, %v543
    %v545 = vpop.f32.mrb[0].mxu0
    %546 = vmatprep.mubr.f32.mxu0 0.0
    %547 = vmatmul.mubr.f32.gmra.mrb[0].mxu0 %v335
    %v548 = vpop.f32.mrb[0].mxu0
    %v549 = vadd.f32 %v228, %v548
    %v550 = vpop.f32.mrb[0].mxu0
    %551 = vmatprep.mubr.f32.mxu0 0.0
    %552 = vmatmul.mubr.f32.gmra.mrb[0].mxu0 %v338
    %v553 = vpop.f32.mrb[0].mxu0
    %v554 = vadd.f32 %v233, %v553
    %v555 = vpop.f32.mrb[0].mxu0
    %556 = vmatprep.mubr.f32.mxu0 0.0
    %557 = vmatmul.mubr.f32.gmra.mrb[0].mxu0 %v341
    %v558 = vpop.f32.mrb[0].mxu0
    %v559 = vadd.f32 %v238, %v558
    %v560 = vpop.f32.mrb[0].mxu0
    %561 = vmatprep.mubr.f32.mxu0 0.0
    %562 = vmatmul.mubr.f32.gmra.mrb[0].mxu0 %v344
    %v563 = vpop.f32.mrb[0].mxu0
    %v564 = vadd.f32 %v243, %v563
    %v565 = vpop.f32.mrb[0].mxu0
    %566 = vmatprep.mubr.f32.mxu0 0.0
    %567 = vmatmul.mubr.f32.gmra.mrb[0].mxu0 %v347
    %v568 = vpop.f32.mrb[0].mxu0
    %v569 = vadd.f32 %v248, %v568
    %v570 = vpop.f32.mrb[0].mxu0
    %571 = vmatprep.mubr.f32.mxu0 0.0
    %572 = vmatmul.mubr.f32.gmra.mrb[0].mxu0 %v350
    %v573 = vpop.f32.mrb[0].mxu0
    %v574 = vadd.f32 %v253, %v573
    %v575 = vpop.f32.mrb[0].mxu0
    %576 = vdwg.mxu0
    %v577 = vmax.f32 %v419, 0.0
    %v578 = vmax.f32 %v424, 0.0
    %v579 = vmax.f32 %v429, 0.0
    %v580 = vmax.f32 %v434, 0.0
    %v581 = vmax.f32 %v439, 0.0
    %v582 = vmax.f32 %v444, 0.0
    %v583 = vmax.f32 %v449, 0.0
    %v584 = vmax.f32 %v454, 0.0
    %v585 = vmax.f32 %v459, 0.0
    %v586 = vmax.f32 %v464, 0.0
    %v587 = vmax.f32 %v469, 0.0
    %v588 = vmax.f32 %v474, 0.0
    %v589 = vmax.f32 %v479, 0.0
    %v590 = vmax.f32 %v484, 0.0
    %v591 = vmax.f32 %v489, 0.0
    %v592 = vmax.f32 %v494, 0.0
    %v593 = vmax.f32 %v499, 0.0
    %v594 = vmax.f32 %v504, 0.0
    %v595 = vmax.f32 %v509, 0.0
    %v596 = vmax.f32 %v514, 0.0
    %v597 = vmax.f32 %v519, 0.0
    %v598 = vmax.f32 %v524, 0.0
    %v599 = vmax.f32 %v529, 0.0
    %v600 = vmax.f32 %v534, 0.0
    %v601 = vmax.f32 %v539, 0.0
    %v602 = vmax.f32 %v544, 0.0
    %v603 = vmax.f32 %v549, 0.0
    %v604 = vmax.f32 %v554, 0.0
    %v605 = vmax.f32 %v559, 0.0
    %v606 = vmax.f32 %v564, 0.0
    %v607 = vmax.f32 %v569, 0.0
    %v608 = vmax.f32 %v574, 0.0
    %v609 = vld [vmem:[%s3] sm:$0xff]
    %v610 = vld [vmem:[%s3 + $0x8] sm:$0xff]
    %v611 = vld [vmem:[%s3 + $0x10] sm:$0xff]
    %v612 = vld [vmem:[%s3 + $0x18] sm:$0xff]
    %v613 = vld [vmem:[%s3 + $0x20] sm:$0xff]
    %v614 = vld [vmem:[%s3 + $0x28] sm:$0xff]
    %v615 = vld [vmem:[%s3 + $0x30] sm:$0xff]
    %v616 = vld [vmem:[%s3 + $0x38] sm:$0xff]
    %v617 = vld [vmem:[%s3 + $0x40] sm:$0xff]
    %v618 = vld [vmem:[%s3 + $0x48] sm:$0xff]
    %v619 = vld [vmem:[%s3 + $0x50] sm:$0xff]
    %v620 = vld [vmem:[%s3 + $0x58] sm:$0xff]
    %v621 = vld [vmem:[%s3 + $0x60] sm:$0xff]
    %v622 = vld [vmem:[%s3 + $0x68] sm:$0xff]
    %v623 = vld [vmem:[%s3 + $0x70] sm:$0xff]
    %v624 = vld [vmem:[%s3 + $0x78] sm:$0xff]
    %v625 = vld [vmem:[%s3 + $0x80] sm:$0xff]
    %v626 = vld [vmem:[%s3 + $0x88] sm:$0xff]
    %v627 = vld [vmem:[%s3 + $0x90] sm:$0xff]
    %v628 = vld [vmem:[%s3 + $0x98] sm:$0xff]
    %v629 = vld [vmem:[%s3 + $0xa0] sm:$0xff]
    %v630 = vld [vmem:[%s3 + $0xa8] sm:$0xff]
    %v631 = vld [vmem:[%s3 + $0xb0] sm:$0xff]
    %v632 = vld [vmem:[%s3 + $0xb8] sm:$0xff]
    %v633 = vld [vmem:[%s3 + $0xc0] sm:$0xff]
    %v634 = vld [vmem:[%s3 + $0xc8] sm:$0xff]
    %v635 = vld [vmem:[%s3 + $0xd0] sm:$0xff]
    %v636 = vld [vmem:[%s3 + $0xd8] sm:$0xff]
    %v637 = vld [vmem:[%s3 + $0xe0] sm:$0xff]
    %v638 = vld [vmem:[%s3 + $0xe8] sm:$0xff]
    %v639 = vld [vmem:[%s3 + $0xf0] sm:$0xff]
    %v640 = vld [vmem:[%s3 + $0xf8] sm:$0xff]
    %v641 = vpack.c.bf16 %v578, %v577
    %v642 = vpack.c.bf16 %v580, %v579
    %v643 = vpack.c.bf16 %v582, %v581
    %v644 = vpack.c.bf16 %v584, %v583
    %v645 = vpack.c.bf16 %v586, %v585
    %v646 = vpack.c.bf16 %v588, %v587
    %v647 = vpack.c.bf16 %v590, %v589
    %v648 = vpack.c.bf16 %v592, %v591
    %v649 = vpack.c.bf16 %v594, %v593
    %v650 = vpack.c.bf16 %v596, %v595
    %v651 = vpack.c.bf16 %v598, %v597
    %v652 = vpack.c.bf16 %v600, %v599
    %v653 = vpack.c.bf16 %v602, %v601
    %v654 = vpack.c.bf16 %v604, %v603
    %v655 = vpack.c.bf16 %v606, %v605
    %v656 = vpack.c.bf16 %v608, %v607
    %v657 = vld [vmem:[%s4] sm:$0xff]
    %v658 = vld [vmem:[%s4 + $0x8] sm:$0xff]
    %v659 = vld [vmem:[%s4 + $0x10] sm:$0xff]
    %v660 = vld [vmem:[%s4 + $0x18] sm:$0xff]
    %v661 = vld [vmem:[%s4 + $0x20] sm:$0xff]
    %v662 = vld [vmem:[%s4 + $0x28] sm:$0xff]
    %v663 = vld [vmem:[%s4 + $0x30] sm:$0xff]
    %v664 = vld [vmem:[%s4 + $0x38] sm:$0xff]
    %v665 = vld [vmem:[%s4 + $0x40] sm:$0xff]
    %v666 = vld [vmem:[%s4 + $0x48] sm:$0xff]
    %v667 = vld [vmem:[%s4 + $0x50] sm:$0xff]
    %v668 = vld [vmem:[%s4 + $0x58] sm:$0xff]
    %v669 = vld [vmem:[%s4 + $0x60] sm:$0xff]
    %v670 = vld [vmem:[%s4 + $0x68] sm:$0xff]
    %v671 = vld [vmem:[%s4 + $0x70] sm:$0xff]
    %v672 = vld [vmem:[%s4 + $0x78] sm:$0xff]
    %v673 = vld [vmem:[%s4 + $0x80] sm:$0xff]
    %v674 = vld [vmem:[%s4 + $0x88] sm:$0xff]
    %v675 = vld [vmem:[%s4 + $0x90] sm:$0xff]
    %v676 = vld [vmem:[%s4 + $0x98] sm:$0xff]
    %v677 = vld [vmem:[%s4 + $0xa0] sm:$0xff]
    %v678 = vld [vmem:[%s4 + $0xa8] sm:$0xff]
    %v679 = vld [vmem:[%s4 + $0xb0] sm:$0xff]
    %v680 = vld [vmem:[%s4 + $0xb8] sm:$0xff]
    %v681 = vld [vmem:[%s4 + $0xc0] sm:$0xff]
    %v682 = vld [vmem:[%s4 + $0xc8] sm:$0xff]
    %v683 = vld [vmem:[%s4 + $0xd0] sm:$0xff]
    %v684 = vld [vmem:[%s4 + $0xd8] sm:$0xff]
    %v685 = vld [vmem:[%s4 + $0xe0] sm:$0xff]
    %v686 = vld [vmem:[%s4 + $0xe8] sm:$0xff]
    %v687 = vld [vmem:[%s4 + $0xf0] sm:$0xff]
    %v688 = vld [vmem:[%s4 + $0xf8] sm:$0xff]
    %690 = vset.pattern.permute.xlu0 0
    %691 = vperm.xlu0 %690, %v657
    %v692 = vpop.permute.xlu0 %691
    %695 = vset.pattern.permute.xlu0 0
    %696 = vperm.xlu0 %695, %v658
    %v697 = vpop.permute.xlu0 %696
    %700 = vset.pattern.permute.xlu0 0
    %701 = vperm.xlu0 %700, %v659
    %v702 = vpop.permute.xlu0 %701
    %705 = vset.pattern.permute.xlu0 0
    %706 = vperm.xlu0 %705, %v660
    %v707 = vpop.permute.xlu0 %706
    %710 = vset.pattern.permute.xlu0 0
    %711 = vperm.xlu0 %710, %v661
    %v712 = vpop.permute.xlu0 %711
    %715 = vset.pattern.permute.xlu0 0
    %716 = vperm.xlu0 %715, %v662
    %v717 = vpop.permute.xlu0 %716
    %720 = vset.pattern.permute.xlu0 0
    %721 = vperm.xlu0 %720, %v663
    %v722 = vpop.permute.xlu0 %721
    %725 = vset.pattern.permute.xlu0 0
    %726 = vperm.xlu0 %725, %v664
    %v727 = vpop.permute.xlu0 %726
    %730 = vset.pattern.permute.xlu0 0
    %731 = vperm.xlu0 %730, %v665
    %v732 = vpop.permute.xlu0 %731
    %735 = vset.pattern.permute.xlu0 0
    %736 = vperm.xlu0 %735, %v666
    %v737 = vpop.permute.xlu0 %736
    %740 = vset.pattern.permute.xlu0 0
    %741 = vperm.xlu0 %740, %v667
    %v742 = vpop.permute.xlu0 %741
    %745 = vset.pattern.permute.xlu0 0
    %746 = vperm.xlu0 %745, %v668
    %v747 = vpop.permute.xlu0 %746
    %750 = vset.pattern.permute.xlu0 0
    %751 = vperm.xlu0 %750, %v669
    %v752 = vpop.permute.xlu0 %751
    %755 = vset.pattern.permute.xlu0 0
    %756 = vperm.xlu0 %755, %v670
    %v757 = vpop.permute.xlu0 %756
    %760 = vset.pattern.permute.xlu0 0
    %761 = vperm.xlu0 %760, %v671
    %v762 = vpop.permute.xlu0 %761
    %765 = vset.pattern.permute.xlu0 0
    %766 = vperm.xlu0 %765, %v672
    %v767 = vpop.permute.xlu0 %766
    %770 = vset.pattern.permute.xlu0 0
    %771 = vperm.xlu0 %770, %v673
    %v772 = vpop.permute.xlu0 %771
    %775 = vset.pattern.permute.xlu0 0
    %776 = vperm.xlu0 %775, %v674
    %v777 = vpop.permute.xlu0 %776
    %780 = vset.pattern.permute.xlu0 0
    %781 = vperm.xlu0 %780, %v675
    %v782 = vpop.permute.xlu0 %781
    %785 = vset.pattern.permute.xlu0 0
    %786 = vperm.xlu0 %785, %v676
    %v787 = vpop.permute.xlu0 %786
    %790 = vset.pattern.permute.xlu0 0
    %791 = vperm.xlu0 %790, %v677
    %v792 = vpop.permute.xlu0 %791
    %795 = vset.pattern.permute.xlu0 0
    %796 = vperm.xlu0 %795, %v678
    %v797 = vpop.permute.xlu0 %796
    %800 = vset.pattern.permute.xlu0 0
    %801 = vperm.xlu0 %800, %v679
    %v802 = vpop.permute.xlu0 %801
    %805 = vset.pattern.permute.xlu0 0
    %806 = vperm.xlu0 %805, %v680
    %v807 = vpop.permute.xlu0 %806
    %810 = vset.pattern.permute.xlu0 0
    %811 = vperm.xlu0 %810, %v681
    %v812 = vpop.permute.xlu0 %811
    %815 = vset.pattern.permute.xlu0 0
    %816 = vperm.xlu0 %815, %v682
    %v817 = vpop.permute.xlu0 %816
    %820 = vset.pattern.permute.xlu0 0
    %821 = vperm.xlu0 %820, %v683
    %v822 = vpop.permute.xlu0 %821
    %825 = vset.pattern.permute.xlu0 0
    %826 = vperm.xlu0 %825, %v684
    %v827 = vpop.permute.xlu0 %826
    %830 = vset.pattern.permute.xlu0 0
    %831 = vperm.xlu0 %830, %v685
    %v832 = vpop.permute.xlu0 %831
    %835 = vset.pattern.permute.xlu0 0
    %836 = vperm.xlu0 %835, %v686
    %v837 = vpop.permute.xlu0 %836
    %840 = vset.pattern.permute.xlu0 0
    %841 = vperm.xlu0 %840, %v687
    %v842 = vpop.permute.xlu0 %841
    %845 = vset.pattern.permute.xlu0 0
    %846 = vperm.xlu0 %845, %v688
    %v847 = vpop.permute.xlu0 %846
    %v881 = vunpack.c.l.b16 %v609
    %v882 = vunpack.c.h.b16 %v609
    %v883 = vunpack.c.l.b16 %v610
    %v884 = vunpack.c.h.b16 %v610
    %v885 = vunpack.c.l.b16 %v611
    %v886 = vunpack.c.h.b16 %v611
    %v887 = vunpack.c.l.b16 %v612
    %v888 = vunpack.c.h.b16 %v612
    %v889 = vunpack.c.l.b16 %v613
    %v890 = vunpack.c.h.b16 %v613
    %v891 = vunpack.c.l.b16 %v614
    %v892 = vunpack.c.h.b16 %v614
    %v893 = vunpack.c.l.b16 %v615
    %v894 = vunpack.c.h.b16 %v615
    %v895 = vunpack.c.l.b16 %v616
    %v896 = vunpack.c.h.b16 %v616
    %v897 = vunpack.c.l.b16 %v617
    %v898 = vunpack.c.h.b16 %v617
    %v899 = vunpack.c.l.b16 %v618
    %v900 = vunpack.c.h.b16 %v618
    %v901 = vunpack.c.l.b16 %v619
    %v902 = vunpack.c.h.b16 %v619
    %v903 = vunpack.c.l.b16 %v620
    %v904 = vunpack.c.h.b16 %v620
    %v905 = vunpack.c.l.b16 %v621
    %v906 = vunpack.c.h.b16 %v621
    %v907 = vunpack.c.l.b16 %v622
    %v908 = vunpack.c.h.b16 %v622
    %v909 = vunpack.c.l.b16 %v623
    %v910 = vunpack.c.h.b16 %v623
    %v911 = vunpack.c.l.b16 %v624
    %v912 = vunpack.c.h.b16 %v624
    %v913 = vunpack.c.l.b16 %v625
    %v914 = vunpack.c.h.b16 %v625
    %v915 = vunpack.c.l.b16 %v626
    %v916 = vunpack.c.h.b16 %v626
    %v917 = vunpack.c.l.b16 %v627
    %v918 = vunpack.c.h.b16 %v627
    %v919 = vunpack.c.l.b16 %v628
    %v920 = vunpack.c.h.b16 %v628
    %v921 = vunpack.c.l.b16 %v629
    %v922 = vunpack.c.h.b16 %v629
    %v923 = vunpack.c.l.b16 %v630
    %v924 = vunpack.c.h.b16 %v630
    %v925 = vunpack.c.l.b16 %v631
    %v926 = vunpack.c.h.b16 %v631
    %v927 = vunpack.c.l.b16 %v632
    %v928 = vunpack.c.h.b16 %v632
    %v929 = vunpack.c.l.b16 %v633
    %v930 = vunpack.c.h.b16 %v633
    %v931 = vunpack.c.l.b16 %v634
    %v932 = vunpack.c.h.b16 %v634
    %v933 = vunpack.c.l.b16 %v635
    %v934 = vunpack.c.h.b16 %v635
    %v935 = vunpack.c.l.b16 %v636
    %v936 = vunpack.c.h.b16 %v636
    %v937 = vunpack.c.l.b16 %v637
    %v938 = vunpack.c.h.b16 %v637
    %v939 = vunpack.c.l.b16 %v638
    %v940 = vunpack.c.h.b16 %v638
    %v941 = vunpack.c.l.b16 %v639
    %v942 = vunpack.c.h.b16 %v639
    %v943 = vunpack.c.l.b16 %v640
    %v944 = vunpack.c.h.b16 %v640
    %v945 = vpack.c.b16 %v883, %v881
    %v946 = vpack.c.b16 %v884, %v882
    %v947 = vpack.c.b16 %v887, %v885
    %v948 = vpack.c.b16 %v888, %v886
    %v949 = vpack.c.b16 %v891, %v889
    %v950 = vpack.c.b16 %v892, %v890
    %v951 = vpack.c.b16 %v895, %v893
    %v952 = vpack.c.b16 %v896, %v894
    %v953 = vpack.c.b16 %v899, %v897
    %v954 = vpack.c.b16 %v900, %v898
    %v955 = vpack.c.b16 %v903, %v901
    %v956 = vpack.c.b16 %v904, %v902
    %v957 = vpack.c.b16 %v907, %v905
    %v958 = vpack.c.b16 %v908, %v906
    %v959 = vpack.c.b16 %v911, %v909
    %v960 = vpack.c.b16 %v912, %v910
    %v961 = vpack.c.b16 %v915, %v913
    %v962 = vpack.c.b16 %v916, %v914
    %v963 = vpack.c.b16 %v919, %v917
    %v964 = vpack.c.b16 %v920, %v918
    %v965 = vpack.c.b16 %v923, %v921
    %v966 = vpack.c.b16 %v924, %v922
    %v967 = vpack.c.b16 %v927, %v925
    %v968 = vpack.c.b16 %v928, %v926
    %v969 = vpack.c.b16 %v931, %v929
    %v970 = vpack.c.b16 %v932, %v930
    %v971 = vpack.c.b16 %v935, %v933
    %v972 = vpack.c.b16 %v936, %v934
    %v973 = vpack.c.b16 %v939, %v937
    %v974 = vpack.c.b16 %v940, %v938
    %v975 = vpack.c.b16 %v943, %v941
    %v976 = vpack.c.b16 %v944, %v942
    %1009 = vmatprep.subr.bf16.mxu0 0
    %1010 = vmatpush1.bf16.msra.mxu0 %v641
    %1011 = vmatprep.subr.bf16.mxu0 0
    %1012 = vmatpush1.bf16.msra.mxu0 %v642
    %1013 = vmatprep.subr.bf16.mxu0 0
    %1014 = vmatpush1.bf16.msra.mxu0 %v643
    %1015 = vmatprep.subr.bf16.mxu0 0
    %1016 = vmatpush1.bf16.msra.mxu0 %v644
    %1017 = vmatprep.subr.bf16.mxu0 0
    %1018 = vmatpush1.bf16.msra.mxu0 %v645
    %1019 = vmatprep.subr.bf16.mxu0 0
    %1020 = vmatpush1.bf16.msra.mxu0 %v646
    %1021 = vmatprep.subr.bf16.mxu0 0
    %1022 = vmatpush1.bf16.msra.mxu0 %v647
    %1023 = vmatprep.subr.bf16.mxu0 0
    %1024 = vmatpush1.bf16.msra.mxu0 %v648
    %1025 = vmatprep.subr.bf16.mxu0 0
    %1026 = vmatpush1.bf16.msra.mxu0 %v649
    %1027 = vmatprep.subr.bf16.mxu0 0
    %1028 = vmatpush1.bf16.msra.mxu0 %v650
    %1029 = vmatprep.subr.bf16.mxu0 0
    %1030 = vmatpush1.bf16.msra.mxu0 %v651
    %1031 = vmatprep.subr.bf16.mxu0 0
    %1032 = vmatpush1.bf16.msra.mxu0 %v652
    %1033 = vmatprep.subr.bf16.mxu0 0
    %1034 = vmatpush1.bf16.msra.mxu0 %v653
    %1035 = vmatprep.subr.bf16.mxu0 0
    %1036 = vmatpush1.bf16.msra.mxu0 %v654
    %1037 = vmatprep.subr.bf16.mxu0 0
    %1038 = vmatpush1.bf16.msra.mxu0 %v655
    %1039 = vmatprep.subr.bf16.mxu0 0
    %1040 = vmatpush1.bf16.msra.mxu0 %v656
    %1041 = vmatprep.mubr.bf16.mxu0 %v946
    %1042 = vmatmul.mubr.bf16.gmra.mrb[0].mxu0 %v945
    %v1043 = vpop.f32.mrb[0].mxu0
    %v1044 = vadd.f32 %v692, %v1043
    %v1045 = vpop.f32.mrb[0].mxu0
    %v1046 = vpop.f32.mrb[0].mxu0
    %v1047 = vadd.f32 %v697, %v1046
    %v1048 = vpop.f32.mrb[0].mxu0
    %1049 = vmatprep.mubr.bf16.mxu0 %v948
    %1050 = vmatmul.mubr.bf16.gmra.mrb[0].mxu0 %v947
    %v1051 = vpop.f32.mrb[0].mxu0
    %v1052 = vadd.f32 %v702, %v1051
    %v1053 = vpop.f32.mrb[0].mxu0
    %v1054 = vpop.f32.mrb[0].mxu0
    %v1055 = vadd.f32 %v707, %v1054
    %v1056 = vpop.f32.mrb[0].mxu0
    %1057 = vmatprep.mubr.bf16.mxu0 %v950
    %1058 = vmatmul.mubr.bf16.gmra.mrb[0].mxu0 %v949
    %v1059 = vpop.f32.mrb[0].mxu0
    %v1060 = vadd.f32 %v712, %v1059
    %v1061 = vpop.f32.mrb[0].mxu0
    %v1062 = vpop.f32.mrb[0].mxu0
    %v1063 = vadd.f32 %v717, %v1062
    %v1064 = vpop.f32.mrb[0].mxu0
    %1065 = vmatprep.mubr.bf16.mxu0 %v952
    %1066 = vmatmul.mubr.bf16.gmra.mrb[0].mxu0 %v951
    %v1067 = vpop.f32.mrb[0].mxu0
    %v1068 = vadd.f32 %v722, %v1067
    %v1069 = vpop.f32.mrb[0].mxu0
    %v1070 = vpop.f32.mrb[0].mxu0
    %v1071 = vadd.f32 %v727, %v1070
    %v1072 = vpop.f32.mrb[0].mxu0
    %1073 = vmatprep.mubr.bf16.mxu0 %v954
    %1074 = vmatmul.mubr.bf16.gmra.mrb[0].mxu0 %v953
    %v1075 = vpop.f32.mrb[0].mxu0
    %v1076 = vadd.f32 %v732, %v1075
    %v1077 = vpop.f32.mrb[0].mxu0
    %v1078 = vpop.f32.mrb[0].mxu0
    %v1079 = vadd.f32 %v737, %v1078
    %v1080 = vpop.f32.mrb[0].mxu0
    %1081 = vmatprep.mubr.bf16.mxu0 %v956
    %1082 = vmatmul.mubr.bf16.gmra.mrb[0].mxu0 %v955
    %v1083 = vpop.f32.mrb[0].mxu0
    %v1084 = vadd.f32 %v742, %v1083
    %v1085 = vpop.f32.mrb[0].mxu0
    %v1086 = vpop.f32.mrb[0].mxu0
    %v1087 = vadd.f32 %v747, %v1086
    %v1088 = vpop.f32.mrb[0].mxu0
    %1089 = vmatprep.mubr.bf16.mxu0 %v958
    %1090 = vmatmul.mubr.bf16.gmra.mrb[0].mxu0 %v957
    %v1091 = vpop.f32.mrb[0].mxu0
    %v1092 = vadd.f32 %v752, %v1091
    %v1093 = vpop.f32.mrb[0].mxu0
    %v1094 = vpop.f32.mrb[0].mxu0
    %v1095 = vadd.f32 %v757, %v1094
    %v1096 = vpop.f32.mrb[0].mxu0
    %1097 = vmatprep.mubr.bf16.mxu0 %v960
    %1098 = vmatmul.mubr.bf16.gmra.mrb[0].mxu0 %v959
    %v1099 = vpop.f32.mrb[0].mxu0
    %v1100 = vadd.f32 %v762, %v1099
    %v1101 = vpop.f32.mrb[0].mxu0
    %v1102 = vpop.f32.mrb[0].mxu0
    %v1103 = vadd.f32 %v767, %v1102
    %v1104 = vpop.f32.mrb[0].mxu0
    %1105 = vmatprep.mubr.bf16.mxu0 %v962
    %1106 = vmatmul.mubr.bf16.gmra.mrb[0].mxu0 %v961
    %v1107 = vpop.f32.mrb[0].mxu0
    %v1108 = vadd.f32 %v772, %v1107
    %v1109 = vpop.f32.mrb[0].mxu0
    %v1110 = vpop.f32.mrb[0].mxu0
    %v1111 = vadd.f32 %v777, %v1110
    %v1112 = vpop.f32.mrb[0].mxu0
    %1113 = vmatprep.mubr.bf16.mxu0 %v964
    %1114 = vmatmul.mubr.bf16.gmra.mrb[0].mxu0 %v963
    %v1115 = vpop.f32.mrb[0].mxu0
    %v1116 = vadd.f32 %v782, %v1115
    %v1117 = vpop.f32.mrb[0].mxu0
    %v1118 = vpop.f32.mrb[0].mxu0
    %v1119 = vadd.f32 %v787, %v1118
    %v1120 = vpop.f32.mrb[0].mxu0
    %1121 = vmatprep.mubr.bf16.mxu0 %v966
    %1122 = vmatmul.mubr.bf16.gmra.mrb[0].mxu0 %v965
    %v1123 = vpop.f32.mrb[0].mxu0
    %v1124 = vadd.f32 %v792, %v1123
    %v1125 = vpop.f32.mrb[0].mxu0
    %v1126 = vpop.f32.mrb[0].mxu0
    %v1127 = vadd.f32 %v797, %v1126
    %v1128 = vpop.f32.mrb[0].mxu0
    %1129 = vmatprep.mubr.bf16.mxu0 %v968
    %1130 = vmatmul.mubr.bf16.gmra.mrb[0].mxu0 %v967
    %v1131 = vpop.f32.mrb[0].mxu0
    %v1132 = vadd.f32 %v802, %v1131
    %v1133 = vpop.f32.mrb[0].mxu0
    %v1134 = vpop.f32.mrb[0].mxu0
    %v1135 = vadd.f32 %v807, %v1134
    %v1136 = vpop.f32.mrb[0].mxu0
    %1137 = vmatprep.mubr.bf16.mxu0 %v970
    %1138 = vmatmul.mubr.bf16.gmra.mrb[0].mxu0 %v969
    %v1139 = vpop.f32.mrb[0].mxu0
    %v1140 = vadd.f32 %v812, %v1139
    %v1141 = vpop.f32.mrb[0].mxu0
    %v1142 = vpop.f32.mrb[0].mxu0
    %v1143 = vadd.f32 %v817, %v1142
    %v1144 = vpop.f32.mrb[0].mxu0
    %1145 = vmatprep.mubr.bf16.mxu0 %v972
    %1146 = vmatmul.mubr.bf16.gmra.mrb[0].mxu0 %v971
    %v1147 = vpop.f32.mrb[0].mxu0
    %v1148 = vadd.f32 %v822, %v1147
    %v1149 = vpop.f32.mrb[0].mxu0
    %v1150 = vpop.f32.mrb[0].mxu0
    %v1151 = vadd.f32 %v827, %v1150
    %v1152 = vpop.f32.mrb[0].mxu0
    %1153 = vmatprep.mubr.bf16.mxu0 %v974
    %1154 = vmatmul.mubr.bf16.gmra.mrb[0].mxu0 %v973
    %v1155 = vpop.f32.mrb[0].mxu0
    %v1156 = vadd.f32 %v832, %v1155
    %v1157 = vpop.f32.mrb[0].mxu0
    %v1158 = vpop.f32.mrb[0].mxu0
    %v1159 = vadd.f32 %v837, %v1158
    %v1160 = vpop.f32.mrb[0].mxu0
    %1161 = vmatprep.mubr.bf16.mxu0 %v976
    %1162 = vmatmul.mubr.bf16.gmra.mrb[0].mxu0 %v975
    %v1163 = vpop.f32.mrb[0].mxu0
    %v1164 = vadd.f32 %v842, %v1163
    %v1165 = vpop.f32.mrb[0].mxu0
    %v1166 = vpop.f32.mrb[0].mxu0
    %v1167 = vadd.f32 %v847, %v1166
    %v1168 = vpop.f32.mrb[0].mxu0
    %1169 = vdwg.mxu0
    %v1170 = vmax.f32 %v1044, 0.0
    %v1171 = vmax.f32 %v1047, 0.0
    %v1172 = vmax.f32 %v1052, 0.0
    %v1173 = vmax.f32 %v1055, 0.0
    %v1174 = vmax.f32 %v1060, 0.0
    %v1175 = vmax.f32 %v1063, 0.0
    %v1176 = vmax.f32 %v1068, 0.0
    %v1177 = vmax.f32 %v1071, 0.0
    %v1178 = vmax.f32 %v1076, 0.0
    %v1179 = vmax.f32 %v1079, 0.0
    %v1180 = vmax.f32 %v1084, 0.0
    %v1181 = vmax.f32 %v1087, 0.0
    %v1182 = vmax.f32 %v1092, 0.0
    %v1183 = vmax.f32 %v1095, 0.0
    %v1184 = vmax.f32 %v1100, 0.0
    %v1185 = vmax.f32 %v1103, 0.0
    %v1186 = vmax.f32 %v1108, 0.0
    %v1187 = vmax.f32 %v1111, 0.0
    %v1188 = vmax.f32 %v1116, 0.0
    %v1189 = vmax.f32 %v1119, 0.0
    %v1190 = vmax.f32 %v1124, 0.0
    %v1191 = vmax.f32 %v1127, 0.0
    %v1192 = vmax.f32 %v1132, 0.0
    %v1193 = vmax.f32 %v1135, 0.0
    %v1194 = vmax.f32 %v1140, 0.0
    %v1195 = vmax.f32 %v1143, 0.0
    %v1196 = vmax.f32 %v1148, 0.0
    %v1197 = vmax.f32 %v1151, 0.0
    %v1198 = vmax.f32 %v1156, 0.0
    %v1199 = vmax.f32 %v1159, 0.0
    %v1200 = vmax.f32 %v1164, 0.0
    %v1201 = vmax.f32 %v1167, 0.0
    %v1202 = vld [vmem:[%s5] sm:$0xff]
    %v1203 = vld [vmem:[%s5 + $0x8] sm:$0xff]
    %v1204 = vld [vmem:[%s5 + $0x10] sm:$0xff]
    %v1205 = vld [vmem:[%s5 + $0x18] sm:$0xff]
    %v1206 = vld [vmem:[%s5 + $0x20] sm:$0xff]
    %v1207 = vld [vmem:[%s5 + $0x28] sm:$0xff]
    %v1208 = vld [vmem:[%s5 + $0x30] sm:$0xff]
    %v1209 = vld [vmem:[%s5 + $0x38] sm:$0xff]
    %v1210 = vld [vmem:[%s5 + $0x40] sm:$0xff]
    %v1211 = vld [vmem:[%s5 + $0x48] sm:$0xff]
    %v1212 = vld [vmem:[%s5 + $0x50] sm:$0xff]
    %v1213 = vld [vmem:[%s5 + $0x58] sm:$0xff]
    %v1214 = vld [vmem:[%s5 + $0x60] sm:$0xff]
    %v1215 = vld [vmem:[%s5 + $0x68] sm:$0xff]
    %v1216 = vld [vmem:[%s5 + $0x70] sm:$0xff]
    %v1217 = vld [vmem:[%s5 + $0x78] sm:$0xff]
    %v1218 = vld [vmem:[%s5 + $0x80] sm:$0xff]
    %v1219 = vld [vmem:[%s5 + $0x88] sm:$0xff]
    %v1220 = vld [vmem:[%s5 + $0x90] sm:$0xff]
    %v1221 = vld [vmem:[%s5 + $0x98] sm:$0xff]
    %v1222 = vld [vmem:[%s5 + $0xa0] sm:$0xff]
    %v1223 = vld [vmem:[%s5 + $0xa8] sm:$0xff]
    %v1224 = vld [vmem:[%s5 + $0xb0] sm:$0xff]
    %v1225 = vld [vmem:[%s5 + $0xb8] sm:$0xff]
    %v1226 = vld [vmem:[%s5 + $0xc0] sm:$0xff]
    %v1227 = vld [vmem:[%s5 + $0xc8] sm:$0xff]
    %v1228 = vld [vmem:[%s5 + $0xd0] sm:$0xff]
    %v1229 = vld [vmem:[%s5 + $0xd8] sm:$0xff]
    %v1230 = vld [vmem:[%s5 + $0xe0] sm:$0xff]
    %v1231 = vld [vmem:[%s5 + $0xe8] sm:$0xff]
    %v1232 = vld [vmem:[%s5 + $0xf0] sm:$0xff]
    %v1233 = vld [vmem:[%s5 + $0xf8] sm:$0xff]
    %1235 = vset.pattern.permute.xlu0 0
    %1236 = vperm.xlu0 %1235, %v1202
    %v1237 = vpop.permute.xlu0 %1236
    %1240 = vset.pattern.permute.xlu0 0
    %1241 = vperm.xlu0 %1240, %v1203
    %v1242 = vpop.permute.xlu0 %1241
    %1245 = vset.pattern.permute.xlu0 0
    %1246 = vperm.xlu0 %1245, %v1204
    %v1247 = vpop.permute.xlu0 %1246
    %1250 = vset.pattern.permute.xlu0 0
    %1251 = vperm.xlu0 %1250, %v1205
    %v1252 = vpop.permute.xlu0 %1251
    %1255 = vset.pattern.permute.xlu0 0
    %1256 = vperm.xlu0 %1255, %v1206
    %v1257 = vpop.permute.xlu0 %1256
    %1260 = vset.pattern.permute.xlu0 0
    %1261 = vperm.xlu0 %1260, %v1207
    %v1262 = vpop.permute.xlu0 %1261
    %1265 = vset.pattern.permute.xlu0 0
    %1266 = vperm.xlu0 %1265, %v1208
    %v1267 = vpop.permute.xlu0 %1266
    %1270 = vset.pattern.permute.xlu0 0
    %1271 = vperm.xlu0 %1270, %v1209
    %v1272 = vpop.permute.xlu0 %1271
    %1275 = vset.pattern.permute.xlu0 0
    %1276 = vperm.xlu0 %1275, %v1210
    %v1277 = vpop.permute.xlu0 %1276
    %1280 = vset.pattern.permute.xlu0 0
    %1281 = vperm.xlu0 %1280, %v1211
    %v1282 = vpop.permute.xlu0 %1281
    %1285 = vset.pattern.permute.xlu0 0
    %1286 = vperm.xlu0 %1285, %v1212
    %v1287 = vpop.permute.xlu0 %1286
    %1290 = vset.pattern.permute.xlu0 0
    %1291 = vperm.xlu0 %1290, %v1213
    %v1292 = vpop.permute.xlu0 %1291
    %1295 = vset.pattern.permute.xlu0 0
    %1296 = vperm.xlu0 %1295, %v1214
    %v1297 = vpop.permute.xlu0 %1296
    %1300 = vset.pattern.permute.xlu0 0
    %1301 = vperm.xlu0 %1300, %v1215
    %v1302 = vpop.permute.xlu0 %1301
    %1305 = vset.pattern.permute.xlu0 0
    %1306 = vperm.xlu0 %1305, %v1216
    %v1307 = vpop.permute.xlu0 %1306
    %1310 = vset.pattern.permute.xlu0 0
    %1311 = vperm.xlu0 %1310, %v1217
    %v1312 = vpop.permute.xlu0 %1311
    %1315 = vset.pattern.permute.xlu0 0
    %1316 = vperm.xlu0 %1315, %v1218
    %v1317 = vpop.permute.xlu0 %1316
    %1320 = vset.pattern.permute.xlu0 0
    %1321 = vperm.xlu0 %1320, %v1219
    %v1322 = vpop.permute.xlu0 %1321
    %1325 = vset.pattern.permute.xlu0 0
    %1326 = vperm.xlu0 %1325, %v1220
    %v1327 = vpop.permute.xlu0 %1326
    %1330 = vset.pattern.permute.xlu0 0
    %1331 = vperm.xlu0 %1330, %v1221
    %v1332 = vpop.permute.xlu0 %1331
    %1335 = vset.pattern.permute.xlu0 0
    %1336 = vperm.xlu0 %1335, %v1222
    %v1337 = vpop.permute.xlu0 %1336
    %1340 = vset.pattern.permute.xlu0 0
    %1341 = vperm.xlu0 %1340, %v1223
    %v1342 = vpop.permute.xlu0 %1341
    %1345 = vset.pattern.permute.xlu0 0
    %1346 = vperm.xlu0 %1345, %v1224
    %v1347 = vpop.permute.xlu0 %1346
    %1350 = vset.pattern.permute.xlu0 0
    %1351 = vperm.xlu0 %1350, %v1225
    %v1352 = vpop.permute.xlu0 %1351
    %1355 = vset.pattern.permute.xlu0 0
    %1356 = vperm.xlu0 %1355, %v1226
    %v1357 = vpop.permute.xlu0 %1356
    %1360 = vset.pattern.permute.xlu0 0
    %1361 = vperm.xlu0 %1360, %v1227
    %v1362 = vpop.permute.xlu0 %1361
    %1365 = vset.pattern.permute.xlu0 0
    %1366 = vperm.xlu0 %1365, %v1228
    %v1367 = vpop.permute.xlu0 %1366
    %1370 = vset.pattern.permute.xlu0 0
    %1371 = vperm.xlu0 %1370, %v1229
    %v1372 = vpop.permute.xlu0 %1371
    %1375 = vset.pattern.permute.xlu0 0
    %1376 = vperm.xlu0 %1375, %v1230
    %v1377 = vpop.permute.xlu0 %1376
    %1380 = vset.pattern.permute.xlu0 0
    %1381 = vperm.xlu0 %1380, %v1231
    %v1382 = vpop.permute.xlu0 %1381
    %1385 = vset.pattern.permute.xlu0 0
    %1386 = vperm.xlu0 %1385, %v1232
    %v1387 = vpop.permute.xlu0 %1386
    %1390 = vset.pattern.permute.xlu0 0
    %1391 = vperm.xlu0 %1390, %v1233
    %v1392 = vpop.permute.xlu0 %1391
    %v1394 = vmul.f32 %v1170, %v1237
    %v1395 = vmul.f32 %v1171, %v1242
    %v1396 = vmul.f32 %v1172, %v1247
    %v1397 = vmul.f32 %v1173, %v1252
    %v1398 = vmul.f32 %v1174, %v1257
    %v1399 = vmul.f32 %v1175, %v1262
    %v1400 = vmul.f32 %v1176, %v1267
    %v1401 = vmul.f32 %v1177, %v1272
    %v1402 = vmul.f32 %v1178, %v1277
    %v1403 = vmul.f32 %v1179, %v1282
    %v1404 = vmul.f32 %v1180, %v1287
    %v1405 = vmul.f32 %v1181, %v1292
    %v1406 = vmul.f32 %v1182, %v1297
    %v1407 = vmul.f32 %v1183, %v1302
    %v1408 = vmul.f32 %v1184, %v1307
    %v1409 = vmul.f32 %v1185, %v1312
    %v1410 = vmul.f32 %v1186, %v1317
    %v1411 = vmul.f32 %v1187, %v1322
    %v1412 = vmul.f32 %v1188, %v1327
    %v1413 = vmul.f32 %v1189, %v1332
    %v1414 = vmul.f32 %v1190, %v1337
    %v1415 = vmul.f32 %v1191, %v1342
    %v1416 = vmul.f32 %v1192, %v1347
    %v1417 = vmul.f32 %v1193, %v1352
    %v1418 = vmul.f32 %v1194, %v1357
    %v1419 = vmul.f32 %v1195, %v1362
    %v1420 = vmul.f32 %v1196, %v1367
    %v1421 = vmul.f32 %v1197, %v1372
    %v1422 = vmul.f32 %v1198, %v1377
    %v1423 = vmul.f32 %v1199, %v1382
    %v1424 = vmul.f32 %v1200, %v1387
    %v1425 = vmul.f32 %v1201, %v1392
    %v1426 = vadd.f32 %v1394, %v1395
    %v1427 = vadd.f32 %v1426, %v1396
    %v1428 = vadd.f32 %v1427, %v1397
    %v1429 = vadd.f32 %v1428, %v1398
    %v1430 = vadd.f32 %v1429, %v1399
    %v1431 = vadd.f32 %v1430, %v1400
    %v1432 = vadd.f32 %v1431, %v1401
    %v1433 = vadd.f32 %v1432, %v1402
    %v1434 = vadd.f32 %v1433, %v1403
    %v1435 = vadd.f32 %v1434, %v1404
    %v1436 = vadd.f32 %v1435, %v1405
    %v1437 = vadd.f32 %v1436, %v1406
    %v1438 = vadd.f32 %v1437, %v1407
    %v1439 = vadd.f32 %v1438, %v1408
    %v1440 = vadd.f32 %v1439, %v1409
    %v1441 = vadd.f32 %v1440, %v1410
    %v1442 = vadd.f32 %v1441, %v1411
    %v1443 = vadd.f32 %v1442, %v1412
    %v1444 = vadd.f32 %v1443, %v1413
    %v1445 = vadd.f32 %v1444, %v1414
    %v1446 = vadd.f32 %v1445, %v1415
    %v1447 = vadd.f32 %v1446, %v1416
    %v1448 = vadd.f32 %v1447, %v1417
    %v1449 = vadd.f32 %v1448, %v1418
    %v1450 = vadd.f32 %v1449, %v1419
    %v1451 = vadd.f32 %v1450, %v1420
    %v1452 = vadd.f32 %v1451, %v1421
    %v1453 = vadd.f32 %v1452, %v1422
    %v1454 = vadd.f32 %v1453, %v1423
    %v1455 = vadd.f32 %v1454, %v1424
    %v1456 = vadd.f32 %v1455, %v1425
    %v1457 = vrot.slane %v1456, 4
    %v1458 = vadd.f32 %v1456, %v1457
    %v1459 = vrot.slane %v1458, 2
    %v1460 = vadd.f32 %v1458, %v1459
    %v1461 = vrot.slane %v1460, 1
    %v1462 = vadd.f32 %v1460, %v1461
    %v1463 = vld [vmem:[#allocation2] sm:$0x1]
    %1465 = vset.pattern.permute.xlu0 0
    %1466 = vperm.xlu0 %1465, %v1463
    %v1467 = vpop.permute.xlu0 %1466
    %v1469 = vlaneseq
    %v1470 = vshrl.u32 %v1469, 7
    %v1471 = vsub.s32 0, %v1470
    %v1472 = vrot.slane %v1467, %v1471
    %v1473 = vadd.f32 %v1462, %v1472
    %1474 = vst [vmem:[#allocation3] sm:$0x1] %v1473
    // Predicated region
    $region30: #{tpu_custom_call.1} parent=1 // pred_check
      _
    $region31: #{tpu_custom_call.1} parent=1 // pred_check_branch
      %1476 = sbr.rel (0) target = $region33
    $region32: #{tpu_custom_call.1} parent=1 // pred_region
      %s1478 = ssub.s32 16, 16
      %1479 = vsyncadd [#allocation4], %s1478
      %s1481 = sshll.u32 [#allocation3], 4
      %s1482 = int_to_ptr.vmem [resolvable:$true] %s1481
      %1484 = dma.vmem_to_hbm [thread:$0]  %s1482, 16, %s7, [#allocation4]
    $region33: #{tpu_custom_call.1} parent=1 // pred_fallthru
      _
    // Predicated region
    $region34: #{tpu_custom_call.1} parent=1 // pred_check
      _
    $region35: #{tpu_custom_call.1} parent=1 // pred_check_branch
      %1486 = sbr.rel (0) target = $region37
    $region36: #{tpu_custom_call.1} parent=1 // pred_region
      %1487 = dma.done [#allocation4], 16
    $region37: #{tpu_custom_call.1} parent=1 // pred_fallthru
      _
    %1488 = vsyncpa [#allocation4], 1

// kernel: tpu_custom_call.1
$region0: #{tpu_custom_call.1}
  #allocation0 [shape = 'u32[]', space=smem, size = 0x4, offset = 0x4, fixed_abs, tag = 'smem constant byte address 0x4 - core index']
  #allocation1 [shape = 'u32[144,128]{1,0:T(1,128)}', space=vmem, size = 0x12000, scoped, tag = 'internal scratch']
  #allocation2 [shape = 'f32[1,1]{1,0:T(1,128)S(1)}', space=vmem, size = 0x200, scoped, tag = 'scoped memory for tpu_custom_call.1']
  %s0 = inlined_call_operand.vmem [shape: f32[8,128], index: 0, kind: input, shape index: {}]
  %s1 = inlined_call_operand.vmem [shape: f32[256,8], index: 1, kind: input, shape index: {}]
  %s2 = inlined_call_operand.vmem [shape: f32[256,1], index: 2, kind: input, shape index: {}]
  %s3 = inlined_call_operand.vmem [shape: bf16[256,256], index: 3, kind: input, shape index: {}]
  %s4 = inlined_call_operand.vmem [shape: f32[256,1], index: 4, kind: input, shape index: {}]
  %s5 = inlined_call_operand.vmem [shape: f32[256,1], index: 5, kind: input, shape index: {}]
  %s6 = inlined_call_operand.<no memory space> [shape: f32[1,1], index: 6, kind: input, shape index: {}]
  %s7 = inlined_call_operand.hbm [shape: f32[1,128], index: 7, kind: output, shape index: {}]
  %s8 = sld [smem:[#allocation0]]
  $region38: #{tpu_custom_call.1} parent=0
    _
  %s10 = ssub.s32 1, %s8
  %s11 = scalar_select 0, %s10, %s8
  %v12 = vstv %s6
  %13 = vst [vmem:[#allocation2] sm:$0x1] %v12
  $region1: #{tpu_custom_call.1} parent=0
    #allocation3 [shape = 'u8[512]{0}', space=vmem, size = 0x400, scoped, tag = 'output window, operand 0, single buffered']
    #allocation4 [shape = 's32[1]{0}', space=sflag, size = 0x4, scoped, tag = 'scoped memory for tpu_custom_call.1']
    %14 = vsyncpa [#allocation4], 0
    // Predicated region
    $region2: #{tpu_custom_call.1} parent=1 // pred_check
      _
    $region3: #{tpu_custom_call.1} parent=1 // pred_check_branch
      %16 = sbr.rel (0) target = $region5
    $region4: #{tpu_custom_call.1} parent=1 // pred_region
      _
    $region5: #{tpu_custom_call.1} parent=1 // pred_fallthru
      _
    // Predicated region
    $region6: #{tpu_custom_call.1} parent=1 // pred_check
      _
    $region7: #{tpu_custom_call.1} parent=1 // pred_check_branch
      %18 = sbr.rel (0) target = $region9
    $region8: #{tpu_custom_call.1} parent=1 // pred_region
      _
    $region9: #{tpu_custom_call.1} parent=1 // pred_fallthru
      _
    // Predicated region
    $region10: #{tpu_custom_call.1} parent=1 // pred_check
      _
    $region11: #{tpu_custom_call.1} parent=1 // pred_check_branch
      %20 = sbr.rel (0) target = $region13
    $region12: #{tpu_custom_call.1} parent=1 // pred_region
      _
    $region13: #{tpu_custom_call.1} parent=1 // pred_fallthru
      _
    // Predicated region
    $region14: #{tpu_custom_call.1} parent=1 // pred_check
      _
    $region15: #{tpu_custom_call.1} parent=1 // pred_check_branch
      %22 = sbr.rel (0) target = $region17
    $region16: #{tpu_custom_call.1} parent=1 // pred_region
      _
    $region17: #{tpu_custom_call.1} parent=1 // pred_fallthru
      _
    // Predicated region
    $region18: #{tpu_custom_call.1} parent=1 // pred_check
      _
    $region19: #{tpu_custom_call.1} parent=1 // pred_check_branch
      %24 = sbr.rel (0) target = $region21
    $region20: #{tpu_custom_call.1} parent=1 // pred_region
      _
    $region21: #{tpu_custom_call.1} parent=1 // pred_fallthru
      _
    // Predicated region
    $region22: #{tpu_custom_call.1} parent=1 // pred_check
      _
    $region23: #{tpu_custom_call.1} parent=1 // pred_check_branch
      %26 = sbr.rel (0) target = $region25
    $region24: #{tpu_custom_call.1} parent=1 // pred_region
      _
    $region25: #{tpu_custom_call.1} parent=1 // pred_fallthru
      _
    // Predicated region
    $region26: #{tpu_custom_call.1} parent=1 // pred_check
      _
    $region27: #{tpu_custom_call.1} parent=1 // pred_check_branch
      %28 = sbr.rel (0) target = $region29
    $region28: #{tpu_custom_call.1} parent=1 // pred_region
      _
    $region29: #{tpu_custom_call.1} parent=1 // pred_fallthru
      _
    %v30 = vld [vmem:[%s0] sm:$0xff]
    %v31 = vld [vmem:[%s1] sm:$0xff]
    %v32 = vld [vmem:[%s1 + $0x8] sm:$0xff]
    %v33 = vld [vmem:[%s1 + $0x10] sm:$0xff]
    %v34 = vld [vmem:[%s1 + $0x18] sm:$0xff]
    %v35 = vld [vmem:[%s1 + $0x20] sm:$0xff]
    %v36 = vld [vmem:[%s1 + $0x28] sm:$0xff]
    %v37 = vld [vmem:[%s1 + $0x30] sm:$0xff]
    %v38 = vld [vmem:[%s1 + $0x38] sm:$0xff]
    %v39 = vld [vmem:[%s1 + $0x40] sm:$0xff]
    %v40 = vld [vmem:[%s1 + $0x48] sm:$0xff]
    %v41 = vld [vmem:[%s1 + $0x50] sm:$0xff]
    %v42 = vld [vmem:[%s1 + $0x58] sm:$0xff]
    %v43 = vld [vmem:[%s1 + $0x60] sm:$0xff]
    %v44 = vld [vmem:[%s1 + $0x68] sm:$0xff]
    %v45 = vld [vmem:[%s1 + $0x70] sm:$0xff]
    %v46 = vld [vmem:[%s1 + $0x78] sm:$0xff]
    %v47 = vld [vmem:[%s1 + $0x80] sm:$0xff]
    %v48 = vld [vmem:[%s1 + $0x88] sm:$0xff]
    %v49 = vld [vmem:[%s1 + $0x90] sm:$0xff]
    %v50 = vld [vmem:[%s1 + $0x98] sm:$0xff]
    %v51 = vld [vmem:[%s1 + $0xa0] sm:$0xff]
    %v52 = vld [vmem:[%s1 + $0xa8] sm:$0xff]
    %v53 = vld [vmem:[%s1 + $0xb0] sm:$0xff]
    %v54 = vld [vmem:[%s1 + $0xb8] sm:$0xff]
    %v55 = vld [vmem:[%s1 + $0xc0] sm:$0xff]
    %v56 = vld [vmem:[%s1 + $0xc8] sm:$0xff]
    %v57 = vld [vmem:[%s1 + $0xd0] sm:$0xff]
    %v58 = vld [vmem:[%s1 + $0xd8] sm:$0xff]
    %v59 = vld [vmem:[%s1 + $0xe0] sm:$0xff]
    %v60 = vld [vmem:[%s1 + $0xe8] sm:$0xff]
    %v61 = vld [vmem:[%s1 + $0xf0] sm:$0xff]
    %v62 = vld [vmem:[%s1 + $0xf8] sm:$0xff]
    %v63 = vld [vmem:[%s2] sm:$0xff]
    %v64 = vld [vmem:[%s2 + $0x8] sm:$0xff]
    %v65 = vld [vmem:[%s2 + $0x10] sm:$0xff]
    %v66 = vld [vmem:[%s2 + $0x18] sm:$0xff]
    %v67 = vld [vmem:[%s2 + $0x20] sm:$0xff]
    %v68 = vld [vmem:[%s2 + $0x28] sm:$0xff]
    %v69 = vld [vmem:[%s2 + $0x30] sm:$0xff]
    %v70 = vld [vmem:[%s2 + $0x38] sm:$0xff]
    %v71 = vld [vmem:[%s2 + $0x40] sm:$0xff]
    %v72 = vld [vmem:[%s2 + $0x48] sm:$0xff]
    %v73 = vld [vmem:[%s2 + $0x50] sm:$0xff]
    %v74 = vld [vmem:[%s2 + $0x58] sm:$0xff]
    %v75 = vld [vmem:[%s2 + $0x60] sm:$0xff]
    %v76 = vld [vmem:[%s2 + $0x68] sm:$0xff]
    %v77 = vld [vmem:[%s2 + $0x70] sm:$0xff]
    %v78 = vld [vmem:[%s2 + $0x78] sm:$0xff]
    %v79 = vld [vmem:[%s2 + $0x80] sm:$0xff]
    %v80 = vld [vmem:[%s2 + $0x88] sm:$0xff]
    %v81 = vld [vmem:[%s2 + $0x90] sm:$0xff]
    %v82 = vld [vmem:[%s2 + $0x98] sm:$0xff]
    %v83 = vld [vmem:[%s2 + $0xa0] sm:$0xff]
    %v84 = vld [vmem:[%s2 + $0xa8] sm:$0xff]
    %v85 = vld [vmem:[%s2 + $0xb0] sm:$0xff]
    %v86 = vld [vmem:[%s2 + $0xb8] sm:$0xff]
    %v87 = vld [vmem:[%s2 + $0xc0] sm:$0xff]
    %v88 = vld [vmem:[%s2 + $0xc8] sm:$0xff]
    %v89 = vld [vmem:[%s2 + $0xd0] sm:$0xff]
    %v90 = vld [vmem:[%s2 + $0xd8] sm:$0xff]
    %v91 = vld [vmem:[%s2 + $0xe0] sm:$0xff]
    %v92 = vld [vmem:[%s2 + $0xe8] sm:$0xff]
    %v93 = vld [vmem:[%s2 + $0xf0] sm:$0xff]
    %v94 = vld [vmem:[%s2 + $0xf8] sm:$0xff]
    %96 = vset.pattern.permute.xlu0 0
    %97 = vperm.xlu0 %96, %v63
    %v98 = vpop.permute.xlu0 %97
    %101 = vset.pattern.permute.xlu0 0
    %102 = vperm.xlu0 %101, %v64
    %v103 = vpop.permute.xlu0 %102
    %106 = vset.pattern.permute.xlu0 0
    %107 = vperm.xlu0 %106, %v65
    %v108 = vpop.permute.xlu0 %107
    %111 = vset.pattern.permute.xlu0 0
    %112 = vperm.xlu0 %111, %v66
    %v113 = vpop.permute.xlu0 %112
    %116 = vset.pattern.permute.xlu0 0
    %117 = vperm.xlu0 %116, %v67
    %v118 = vpop.permute.xlu0 %117
    %121 = vset.pattern.permute.xlu0 0
    %122 = vperm.xlu0 %121, %v68
    %v123 = vpop.permute.xlu0 %122
    %126 = vset.pattern.permute.xlu0 0
    %127 = vperm.xlu0 %126, %v69
    %v128 = vpop.permute.xlu0 %127
    %131 = vset.pattern.permute.xlu0 0
    %132 = vperm.xlu0 %131, %v70
    %v133 = vpop.permute.xlu0 %132
    %136 = vset.pattern.permute.xlu0 0
    %137 = vperm.xlu0 %136, %v71
    %v138 = vpop.permute.xlu0 %137
    %141 = vset.pattern.permute.xlu0 0
    %142 = vperm.xlu0 %141, %v72
    %v143 = vpop.permute.xlu0 %142
    %146 = vset.pattern.permute.xlu0 0
    %147 = vperm.xlu0 %146, %v73
    %v148 = vpop.permute.xlu0 %147
    %151 = vset.pattern.permute.xlu0 0
    %152 = vperm.xlu0 %151, %v74
    %v153 = vpop.permute.xlu0 %152
    %156 = vset.pattern.permute.xlu0 0
    %157 = vperm.xlu0 %156, %v75
    %v158 = vpop.permute.xlu0 %157
    %161 = vset.pattern.permute.xlu0 0
    %162 = vperm.xlu0 %161, %v76
    %v163 = vpop.permute.xlu0 %162
    %166 = vset.pattern.permute.xlu0 0
    %167 = vperm.xlu0 %166, %v77
    %v168 = vpop.permute.xlu0 %167
    %171 = vset.pattern.permute.xlu0 0
    %172 = vperm.xlu0 %171, %v78
    %v173 = vpop.permute.xlu0 %172
    %176 = vset.pattern.permute.xlu0 0
    %177 = vperm.xlu0 %176, %v79
    %v178 = vpop.permute.xlu0 %177
    %181 = vset.pattern.permute.xlu0 0
    %182 = vperm.xlu0 %181, %v80
    %v183 = vpop.permute.xlu0 %182
    %186 = vset.pattern.permute.xlu0 0
    %187 = vperm.xlu0 %186, %v81
    %v188 = vpop.permute.xlu0 %187
    %191 = vset.pattern.permute.xlu0 0
    %192 = vperm.xlu0 %191, %v82
    %v193 = vpop.permute.xlu0 %192
    %196 = vset.pattern.permute.xlu0 0
    %197 = vperm.xlu0 %196, %v83
    %v198 = vpop.permute.xlu0 %197
    %201 = vset.pattern.permute.xlu0 0
    %202 = vperm.xlu0 %201, %v84
    %v203 = vpop.permute.xlu0 %202
    %206 = vset.pattern.permute.xlu0 0
    %207 = vperm.xlu0 %206, %v85
    %v208 = vpop.permute.xlu0 %207
    %211 = vset.pattern.permute.xlu0 0
    %212 = vperm.xlu0 %211, %v86
    %v213 = vpop.permute.xlu0 %212
    %216 = vset.pattern.permute.xlu0 0
    %217 = vperm.xlu0 %216, %v87
    %v218 = vpop.permute.xlu0 %217
    %221 = vset.pattern.permute.xlu0 0
    %222 = vperm.xlu0 %221, %v88
    %v223 = vpop.permute.xlu0 %222
    %226 = vset.pattern.permute.xlu0 0
    %227 = vperm.xlu0 %226, %v89
    %v228 = vpop.permute.xlu0 %227
    %231 = vset.pattern.permute.xlu0 0
    %232 = vperm.xlu0 %231, %v90
    %v233 = vpop.permute.xlu0 %232
    %236 = vset.pattern.permute.xlu0 0
    %237 = vperm.xlu0 %236, %v91
    %v238 = vpop.permute.xlu0 %237
    %241 = vset.pattern.permute.xlu0 0
    %242 = vperm.xlu0 %241, %v92
    %v243 = vpop.permute.xlu0 %242
    %246 = vset.pattern.permute.xlu0 0
    %247 = vperm.xlu0 %246, %v93
    %v248 = vpop.permute.xlu0 %247
    %251 = vset.pattern.permute.xlu0 0
    %252 = vperm.xlu0 %251, %v94
    %v253 = vpop.permute.xlu0 %252
    %vm255 = vcmask 64512
    %v257 = vsel %vm255, %v31, 0
    %v260 = vsel %vm255, %v32, 0
    %v263 = vsel %vm255, %v33, 0
    %v266 = vsel %vm255, %v34, 0
    %v269 = vsel %vm255, %v35, 0
    %v272 = vsel %vm255, %v36, 0
    %v275 = vsel %vm255, %v37, 0
    %v278 = vsel %vm255, %v38, 0
    %v281 = vsel %vm255, %v39, 0
    %v284 = vsel %vm255, %v40, 0
    %v287 = vsel %vm255, %v41, 0
    %v290 = vsel %vm255, %v42, 0
    %v293 = vsel %vm255, %v43, 0
    %v296 = vsel %vm255, %v44, 0
    %v299 = vsel %vm255, %v45, 0
    %v302 = vsel %vm255, %v46, 0
    %v305 = vsel %vm255, %v47, 0
    %v308 = vsel %vm255, %v48, 0
    %v311 = vsel %vm255, %v49, 0
    %v314 = vsel %vm255, %v50, 0
    %v317 = vsel %vm255, %v51, 0
    %v320 = vsel %vm255, %v52, 0
    %v323 = vsel %vm255, %v53, 0
    %v326 = vsel %vm255, %v54, 0
    %v329 = vsel %vm255, %v55, 0
    %v332 = vsel %vm255, %v56, 0
    %v335 = vsel %vm255, %v57, 0
    %v338 = vsel %vm255, %v58, 0
    %v341 = vsel %vm255, %v59, 0
    %v344 = vsel %vm255, %v60, 0
    %v347 = vsel %vm255, %v61, 0
    %v350 = vsel %vm255, %v62, 0
    %352 = vmatprep.subr.mxu0 0.0
    %353 = vmatpush1.msra.mxu0 %v30
    %354 = vmatprep.subr.mxu0 0.0
    %355 = vmatpush1.msra.mxu0 0.0
    %356 = vmatprep.subr.mxu0 0.0
    %357 = vmatpush1.msra.mxu0 0.0
    %358 = vmatprep.subr.mxu0 0.0
    %359 = vmatpush1.msra.mxu0 0.0
    %360 = vmatprep.subr.mxu0 0.0
    %361 = vmatpush1.msra.mxu0 0.0
    %362 = vmatprep.subr.mxu0 0.0
    %363 = vmatpush1.msra.mxu0 0.0
    %364 = vmatprep.subr.mxu0 0.0
    %365 = vmatpush1.msra.mxu0 0.0
    %366 = vmatprep.subr.mxu0 0.0
    %367 = vmatpush1.msra.mxu0 0.0
    %368 = vmatprep.subr.mxu0 0.0
    %369 = vmatpush1.msra.mxu0 0.0
    %370 = vmatprep.subr.mxu0 0.0
    %371 = vmatpush1.msra.mxu0 0.0
    %372 = vmatprep.subr.mxu0 0.0
    %373 = vmatpush1.msra.mxu0 0.0
    %374 = vmatprep.subr.mxu0 0.0
    %375 = vmatpush1.msra.mxu0 0.0
    %376 = vmatprep.subr.mxu0 0.0
    %377 = vmatpush1.msra.mxu0 0.0
    %378 = vmatprep.subr.mxu0 0.0
    %379 = vmatpush1.msra.mxu0 0.0
    %380 = vmatprep.subr.mxu0 0.0
    %381 = vmatpush1.msra.mxu0 0.0
    %382 = vmatprep.subr.mxu0 0.0
    %383 = vmatpush1.msra.mxu0 0.0
    %384 = vmatprep.subr.mxu0 0.0
    %385 = vmatpush1.msra.mxu0 0.0
    %386 = vmatprep.subr.mxu0 0.0
    %387 = vmatpush1.msra.mxu0 0.0
    %388 = vmatprep.subr.mxu0 0.0
    %389 = vmatpush1.msra.mxu0 0.0
    %390 = vmatprep.subr.mxu0 0.0
    %391 = vmatpush1.msra.mxu0 0.0
    %392 = vmatprep.subr.mxu0 0.0
    %393 = vmatpush1.msra.mxu0 0.0
    %394 = vmatprep.subr.mxu0 0.0
    %395 = vmatpush1.msra.mxu0 0.0
    %396 = vmatprep.subr.mxu0 0.0
    %397 = vmatpush1.msra.mxu0 0.0
    %398 = vmatprep.subr.mxu0 0.0
    %399 = vmatpush1.msra.mxu0 0.0
    %400 = vmatprep.subr.mxu0 0.0
    %401 = vmatpush1.msra.mxu0 0.0
    %402 = vmatprep.subr.mxu0 0.0
    %403 = vmatpush1.msra.mxu0 0.0
    %404 = vmatprep.subr.mxu0 0.0
    %405 = vmatpush1.msra.mxu0 0.0
    %406 = vmatprep.subr.mxu0 0.0
    %407 = vmatpush1.msra.mxu0 0.0
    %408 = vmatprep.subr.mxu0 0.0
    %409 = vmatpush1.msra.mxu0 0.0
    %410 = vmatprep.subr.mxu0 0.0
    %411 = vmatpush1.msra.mxu0 0.0
    %412 = vmatprep.subr.mxu0 0.0
    %413 = vmatpush1.msra.mxu0 0.0
    %414 = vmatprep.subr.mxu0 0.0
    %415 = vmatpush1.msra.mxu0 0.0
    %416 = vmatprep.mubr.f32.mxu0 0.0
    %417 = vmatmul.mubr.f32.gmra.mrb[0].mxu0 %v257
    %v418 = vpop.f32.mrb[0].mxu0
    %v419 = vadd.f32 %v98, %v418
    %v420 = vpop.f32.mrb[0].mxu0
    %421 = vmatprep.mubr.f32.mxu0 0.0
    %422 = vmatmul.mubr.f32.gmra.mrb[0].mxu0 %v260
    %v423 = vpop.f32.mrb[0].mxu0
    %v424 = vadd.f32 %v103, %v423
    %v425 = vpop.f32.mrb[0].mxu0
    %426 = vmatprep.mubr.f32.mxu0 0.0
    %427 = vmatmul.mubr.f32.gmra.mrb[0].mxu0 %v263
    %v428 = vpop.f32.mrb[0].mxu0
    %v429 = vadd.f32 %v108, %v428
    %v430 = vpop.f32.mrb[0].mxu0
    %431 = vmatprep.mubr.f32.mxu0 0.0
    %432 = vmatmul.mubr.f32.gmra.mrb[0].mxu0 %v266
    %v433 = vpop.f32.mrb[0].mxu0
    %v434 = vadd.f32 %v113, %v433
    %v435 = vpop.f32.mrb[0].mxu0
    %436 = vmatprep.mubr.f32.mxu0 0.0
    %437 = vmatmul.mubr.f32.gmra.mrb[0].mxu0 %v269
    %v438 = vpop.f32.mrb[0].mxu0
    %v439 = vadd.f32 %v118, %v438
    %v440 = vpop.f32.mrb[0].mxu0
    %441 = vmatprep.mubr.f32.mxu0 0.0
    %442 = vmatmul.mubr.f32.gmra.mrb[0].mxu0 %v272
    %v443 = vpop.f32.mrb[0].mxu0
    %v444 = vadd.f32 %v123, %v443
    %v445 = vpop.f32.mrb[0].mxu0
    %446 = vmatprep.mubr.f32.mxu0 0.0
    %447 = vmatmul.mubr.f32.gmra.mrb[0].mxu0 %v275
    %v448 = vpop.f32.mrb[0].mxu0
    %v449 = vadd.f32 %v128, %v448
    %v450 = vpop.f32.mrb[0].mxu0
    %451 = vmatprep.mubr.f32.mxu0 0.0
    %452 = vmatmul.mubr.f32.gmra.mrb[0].mxu0 %v278
    %v453 = vpop.f32.mrb[0].mxu0
    %v454 = vadd.f32 %v133, %v453
    %v455 = vpop.f32.mrb[0].mxu0
    %456 = vmatprep.mubr.f32.mxu0 0.0
    %457 = vmatmul.mubr.f32.gmra.mrb[0].mxu0 %v281
    %v458 = vpop.f32.mrb[0].mxu0
    %v459 = vadd.f32 %v138, %v458
    %v460 = vpop.f32.mrb[0].mxu0
    %461 = vmatprep.mubr.f32.mxu0 0.0
    %462 = vmatmul.mubr.f32.gmra.mrb[0].mxu0 %v284
    %v463 = vpop.f32.mrb[0].mxu0
    %v464 = vadd.f32 %v143, %v463
    %v465 = vpop.f32.mrb[0].mxu0
    %466 = vmatprep.mubr.f32.mxu0 0.0
    %467 = vmatmul.mubr.f32.gmra.mrb[0].mxu0 %v287
    %v468 = vpop.f32.mrb[0].mxu0
    %v469 = vadd.f32 %v148, %v468
    %v470 = vpop.f32.mrb[0].mxu0
    %471 = vmatprep.mubr.f32.mxu0 0.0
    %472 = vmatmul.mubr.f32.gmra.mrb[0].mxu0 %v290
    %v473 = vpop.f32.mrb[0].mxu0
    %v474 = vadd.f32 %v153, %v473
    %v475 = vpop.f32.mrb[0].mxu0
    %476 = vmatprep.mubr.f32.mxu0 0.0
    %477 = vmatmul.mubr.f32.gmra.mrb[0].mxu0 %v293
    %v478 = vpop.f32.mrb[0].mxu0
    %v479 = vadd.f32 %v158, %v478
    %v480 = vpop.f32.mrb[0].mxu0
    %481 = vmatprep.mubr.f32.mxu0 0.0
    %482 = vmatmul.mubr.f32.gmra.mrb[0].mxu0 %v296
    %v483 = vpop.f32.mrb[0].mxu0
    %v484 = vadd.f32 %v163, %v483
    %v485 = vpop.f32.mrb[0].mxu0
    %486 = vmatprep.mubr.f32.mxu0 0.0
    %487 = vmatmul.mubr.f32.gmra.mrb[0].mxu0 %v299
    %v488 = vpop.f32.mrb[0].mxu0
    %v489 = vadd.f32 %v168, %v488
    %v490 = vpop.f32.mrb[0].mxu0
    %491 = vmatprep.mubr.f32.mxu0 0.0
    %492 = vmatmul.mubr.f32.gmra.mrb[0].mxu0 %v302
    %v493 = vpop.f32.mrb[0].mxu0
    %v494 = vadd.f32 %v173, %v493
    %v495 = vpop.f32.mrb[0].mxu0
    %496 = vmatprep.mubr.f32.mxu0 0.0
    %497 = vmatmul.mubr.f32.gmra.mrb[0].mxu0 %v305
    %v498 = vpop.f32.mrb[0].mxu0
    %v499 = vadd.f32 %v178, %v498
    %v500 = vpop.f32.mrb[0].mxu0
    %501 = vmatprep.mubr.f32.mxu0 0.0
    %502 = vmatmul.mubr.f32.gmra.mrb[0].mxu0 %v308
    %v503 = vpop.f32.mrb[0].mxu0
    %v504 = vadd.f32 %v183, %v503
    %v505 = vpop.f32.mrb[0].mxu0
    %506 = vmatprep.mubr.f32.mxu0 0.0
    %507 = vmatmul.mubr.f32.gmra.mrb[0].mxu0 %v311
    %v508 = vpop.f32.mrb[0].mxu0
    %v509 = vadd.f32 %v188, %v508
    %v510 = vpop.f32.mrb[0].mxu0
    %511 = vmatprep.mubr.f32.mxu0 0.0
    %512 = vmatmul.mubr.f32.gmra.mrb[0].mxu0 %v314
    %v513 = vpop.f32.mrb[0].mxu0
    %v514 = vadd.f32 %v193, %v513
    %v515 = vpop.f32.mrb[0].mxu0
    %516 = vmatprep.mubr.f32.mxu0 0.0
    %517 = vmatmul.mubr.f32.gmra.mrb[0].mxu0 %v317
    %v518 = vpop.f32.mrb[0].mxu0
    %v519 = vadd.f32 %v198, %v518
    %v520 = vpop.f32.mrb[0].mxu0
    %521 = vmatprep.mubr.f32.mxu0 0.0
    %522 = vmatmul.mubr.f32.gmra.mrb[0].mxu0 %v320
    %v523 = vpop.f32.mrb[0].mxu0
    %v524 = vadd.f32 %v203, %v523
    %v525 = vpop.f32.mrb[0].mxu0
    %526 = vmatprep.mubr.f32.mxu0 0.0
    %527 = vmatmul.mubr.f32.gmra.mrb[0].mxu0 %v323
    %v528 = vpop.f32.mrb[0].mxu0
    %v529 = vadd.f32 %v208, %v528
    %v530 = vpop.f32.mrb[0].mxu0
    %531 = vmatprep.mubr.f32.mxu0 0.0
    %532 = vmatmul.mubr.f32.gmra.mrb[0].mxu0 %v326
    %v533 = vpop.f32.mrb[0].mxu0
    %v534 = vadd.f32 %v213, %v533
    %v535 = vpop.f32.mrb[0].mxu0
    %536 = vmatprep.mubr.f32.mxu0 0.0
    %537 = vmatmul.mubr.f32.gmra.mrb[0].mxu0 %v329
    %v538 = vpop.f32.mrb[0].mxu0
    %v539 = vadd.f32 %v218, %v538
    %v540 = vpop.f32.mrb[0].mxu0
    %541 = vmatprep.mubr.f32.mxu0 0.0
    %542 = vmatmul.mubr.f32.gmra.mrb[0].mxu0 %v332
    %v543 = vpop.f32.mrb[0].mxu0
    %v544 = vadd.f32 %v223, %v543
    %v545 = vpop.f32.mrb[0].mxu0
    %546 = vmatprep.mubr.f32.mxu0 0.0
    %547 = vmatmul.mubr.f32.gmra.mrb[0].mxu0 %v335
    %v548 = vpop.f32.mrb[0].mxu0
    %v549 = vadd.f32 %v228, %v548
    %v550 = vpop.f32.mrb[0].mxu0
    %551 = vmatprep.mubr.f32.mxu0 0.0
    %552 = vmatmul.mubr.f32.gmra.mrb[0].mxu0 %v338
    %v553 = vpop.f32.mrb[0].mxu0
    %v554 = vadd.f32 %v233, %v553
    %v555 = vpop.f32.mrb[0].mxu0
    %556 = vmatprep.mubr.f32.mxu0 0.0
    %557 = vmatmul.mubr.f32.gmra.mrb[0].mxu0 %v341
    %v558 = vpop.f32.mrb[0].mxu0
    %v559 = vadd.f32 %v238, %v558
    %v560 = vpop.f32.mrb[0].mxu0
    %561 = vmatprep.mubr.f32.mxu0 0.0
    %562 = vmatmul.mubr.f32.gmra.mrb[0].mxu0 %v344
    %v563 = vpop.f32.mrb[0].mxu0
    %v564 = vadd.f32 %v243, %v563
    %v565 = vpop.f32.mrb[0].mxu0
    %566 = vmatprep.mubr.f32.mxu0 0.0
    %567 = vmatmul.mubr.f32.gmra.mrb[0].mxu0 %v347
    %v568 = vpop.f32.mrb[0].mxu0
    %v569 = vadd.f32 %v248, %v568
    %v570 = vpop.f32.mrb[0].mxu0
    %571 = vmatprep.mubr.f32.mxu0 0.0
    %572 = vmatmul.mubr.f32.gmra.mrb[0].mxu0 %v350
    %v573 = vpop.f32.mrb[0].mxu0
    %v574 = vadd.f32 %v253, %v573
    %v575 = vpop.f32.mrb[0].mxu0
    %576 = vdwg.mxu0
    %v577 = vmax.f32 %v419, 0.0
    %v578 = vmax.f32 %v424, 0.0
    %v579 = vmax.f32 %v429, 0.0
    %v580 = vmax.f32 %v434, 0.0
    %v581 = vmax.f32 %v439, 0.0
    %v582 = vmax.f32 %v444, 0.0
    %v583 = vmax.f32 %v449, 0.0
    %v584 = vmax.f32 %v454, 0.0
    %v585 = vmax.f32 %v459, 0.0
    %v586 = vmax.f32 %v464, 0.0
    %v587 = vmax.f32 %v469, 0.0
    %v588 = vmax.f32 %v474, 0.0
    %v589 = vmax.f32 %v479, 0.0
    %v590 = vmax.f32 %v484, 0.0
    %v591 = vmax.f32 %v489, 0.0
    %v592 = vmax.f32 %v494, 0.0
    %v593 = vmax.f32 %v499, 0.0
    %v594 = vmax.f32 %v504, 0.0
    %v595 = vmax.f32 %v509, 0.0
    %v596 = vmax.f32 %v514, 0.0
    %v597 = vmax.f32 %v519, 0.0
    %v598 = vmax.f32 %v524, 0.0
    %v599 = vmax.f32 %v529, 0.0
    %v600 = vmax.f32 %v534, 0.0
    %v601 = vmax.f32 %v539, 0.0
    %v602 = vmax.f32 %v544, 0.0
    %v603 = vmax.f32 %v549, 0.0
    %v604 = vmax.f32 %v554, 0.0
    %v605 = vmax.f32 %v559, 0.0
    %v606 = vmax.f32 %v564, 0.0
    %v607 = vmax.f32 %v569, 0.0
    %v608 = vmax.f32 %v574, 0.0
    %v609 = vld [vmem:[%s3] sm:$0xff]
    %v610 = vld [vmem:[%s3 + $0x8] sm:$0xff]
    %v611 = vld [vmem:[%s3 + $0x10] sm:$0xff]
    %v612 = vld [vmem:[%s3 + $0x18] sm:$0xff]
    %v613 = vld [vmem:[%s3 + $0x20] sm:$0xff]
    %v614 = vld [vmem:[%s3 + $0x28] sm:$0xff]
    %v615 = vld [vmem:[%s3 + $0x30] sm:$0xff]
    %v616 = vld [vmem:[%s3 + $0x38] sm:$0xff]
    %v617 = vld [vmem:[%s3 + $0x40] sm:$0xff]
    %v618 = vld [vmem:[%s3 + $0x48] sm:$0xff]
    %v619 = vld [vmem:[%s3 + $0x50] sm:$0xff]
    %v620 = vld [vmem:[%s3 + $0x58] sm:$0xff]
    %v621 = vld [vmem:[%s3 + $0x60] sm:$0xff]
    %v622 = vld [vmem:[%s3 + $0x68] sm:$0xff]
    %v623 = vld [vmem:[%s3 + $0x70] sm:$0xff]
    %v624 = vld [vmem:[%s3 + $0x78] sm:$0xff]
    %v625 = vld [vmem:[%s3 + $0x80] sm:$0xff]
    %v626 = vld [vmem:[%s3 + $0x88] sm:$0xff]
    %v627 = vld [vmem:[%s3 + $0x90] sm:$0xff]
    %v628 = vld [vmem:[%s3 + $0x98] sm:$0xff]
    %v629 = vld [vmem:[%s3 + $0xa0] sm:$0xff]
    %v630 = vld [vmem:[%s3 + $0xa8] sm:$0xff]
    %v631 = vld [vmem:[%s3 + $0xb0] sm:$0xff]
    %v632 = vld [vmem:[%s3 + $0xb8] sm:$0xff]
    %v633 = vld [vmem:[%s3 + $0xc0] sm:$0xff]
    %v634 = vld [vmem:[%s3 + $0xc8] sm:$0xff]
    %v635 = vld [vmem:[%s3 + $0xd0] sm:$0xff]
    %v636 = vld [vmem:[%s3 + $0xd8] sm:$0xff]
    %v637 = vld [vmem:[%s3 + $0xe0] sm:$0xff]
    %v638 = vld [vmem:[%s3 + $0xe8] sm:$0xff]
    %v639 = vld [vmem:[%s3 + $0xf0] sm:$0xff]
    %v640 = vld [vmem:[%s3 + $0xf8] sm:$0xff]
    %v641 = vpack.c.bf16 %v578, %v577
    %v642 = vpack.c.bf16 %v580, %v579
    %v643 = vpack.c.bf16 %v582, %v581
    %v644 = vpack.c.bf16 %v584, %v583
    %v645 = vpack.c.bf16 %v586, %v585
    %v646 = vpack.c.bf16 %v588, %v587
    %v647 = vpack.c.bf16 %v590, %v589
    %v648 = vpack.c.bf16 %v592, %v591
    %v649 = vpack.c.bf16 %v594, %v593
    %v650 = vpack.c.bf16 %v596, %v595
    %v651 = vpack.c.bf16 %v598, %v597
    %v652 = vpack.c.bf16 %v600, %v599
    %v653 = vpack.c.bf16 %v602, %v601
    %v654 = vpack.c.bf16 %v604, %v603
    %v655 = vpack.c.bf16 %v606, %v605
    %v656 = vpack.c.bf16 %v608, %v607
    %v657 = vld [vmem:[%s4] sm:$0xff]
    %v658 = vld [vmem:[%s4 + $0x8] sm:$0xff]
    %v659 = vld [vmem:[%s4 + $0x10] sm:$0xff]
    %v660 = vld [vmem:[%s4 + $0x18] sm:$0xff]
    %v661 = vld [vmem:[%s4 + $0x20] sm:$0xff]
    %v662 = vld [vmem:[%s4 + $0x28] sm:$0xff]
    %v663 = vld [vmem:[%s4 + $0x30] sm:$0xff]
    %v664 = vld [vmem:[%s4 + $0x38] sm:$0xff]
    %v665 = vld [vmem:[%s4 + $0x40] sm:$0xff]
    %v666 = vld [vmem:[%s4 + $0x48] sm:$0xff]
    %v667 = vld [vmem:[%s4 + $0x50] sm:$0xff]
    %v668 = vld [vmem:[%s4 + $0x58] sm:$0xff]
    %v669 = vld [vmem:[%s4 + $0x60] sm:$0xff]
    %v670 = vld [vmem:[%s4 + $0x68] sm:$0xff]
    %v671 = vld [vmem:[%s4 + $0x70] sm:$0xff]
    %v672 = vld [vmem:[%s4 + $0x78] sm:$0xff]
    %v673 = vld [vmem:[%s4 + $0x80] sm:$0xff]
    %v674 = vld [vmem:[%s4 + $0x88] sm:$0xff]
    %v675 = vld [vmem:[%s4 + $0x90] sm:$0xff]
    %v676 = vld [vmem:[%s4 + $0x98] sm:$0xff]
    %v677 = vld [vmem:[%s4 + $0xa0] sm:$0xff]
    %v678 = vld [vmem:[%s4 + $0xa8] sm:$0xff]
    %v679 = vld [vmem:[%s4 + $0xb0] sm:$0xff]
    %v680 = vld [vmem:[%s4 + $0xb8] sm:$0xff]
    %v681 = vld [vmem:[%s4 + $0xc0] sm:$0xff]
    %v682 = vld [vmem:[%s4 + $0xc8] sm:$0xff]
    %v683 = vld [vmem:[%s4 + $0xd0] sm:$0xff]
    %v684 = vld [vmem:[%s4 + $0xd8] sm:$0xff]
    %v685 = vld [vmem:[%s4 + $0xe0] sm:$0xff]
    %v686 = vld [vmem:[%s4 + $0xe8] sm:$0xff]
    %v687 = vld [vmem:[%s4 + $0xf0] sm:$0xff]
    %v688 = vld [vmem:[%s4 + $0xf8] sm:$0xff]
    %690 = vset.pattern.permute.xlu0 0
    %691 = vperm.xlu0 %690, %v657
    %v692 = vpop.permute.xlu0 %691
    %695 = vset.pattern.permute.xlu0 0
    %696 = vperm.xlu0 %695, %v658
    %v697 = vpop.permute.xlu0 %696
    %700 = vset.pattern.permute.xlu0 0
    %701 = vperm.xlu0 %700, %v659
    %v702 = vpop.permute.xlu0 %701
    %705 = vset.pattern.permute.xlu0 0
    %706 = vperm.xlu0 %705, %v660
    %v707 = vpop.permute.xlu0 %706
    %710 = vset.pattern.permute.xlu0 0
    %711 = vperm.xlu0 %710, %v661
    %v712 = vpop.permute.xlu0 %711
    %715 = vset.pattern.permute.xlu0 0
    %716 = vperm.xlu0 %715, %v662
    %v717 = vpop.permute.xlu0 %716
    %720 = vset.pattern.permute.xlu0 0
    %721 = vperm.xlu0 %720, %v663
    %v722 = vpop.permute.xlu0 %721
    %725 = vset.pattern.permute.xlu0 0
    %726 = vperm.xlu0 %725, %v664
    %v727 = vpop.permute.xlu0 %726
    %730 = vset.pattern.permute.xlu0 0
    %731 = vperm.xlu0 %730, %v665
    %v732 = vpop.permute.xlu0 %731
    %735 = vset.pattern.permute.xlu0 0
    %736 = vperm.xlu0 %735, %v666
    %v737 = vpop.permute.xlu0 %736
    %740 = vset.pattern.permute.xlu0 0
    %741 = vperm.xlu0 %740, %v667
    %v742 = vpop.permute.xlu0 %741
    %745 = vset.pattern.permute.xlu0 0
    %746 = vperm.xlu0 %745, %v668
    %v747 = vpop.permute.xlu0 %746
    %750 = vset.pattern.permute.xlu0 0
    %751 = vperm.xlu0 %750, %v669
    %v752 = vpop.permute.xlu0 %751
    %755 = vset.pattern.permute.xlu0 0
    %756 = vperm.xlu0 %755, %v670
    %v757 = vpop.permute.xlu0 %756
    %760 = vset.pattern.permute.xlu0 0
    %761 = vperm.xlu0 %760, %v671
    %v762 = vpop.permute.xlu0 %761
    %765 = vset.pattern.permute.xlu0 0
    %766 = vperm.xlu0 %765, %v672
    %v767 = vpop.permute.xlu0 %766
    %770 = vset.pattern.permute.xlu0 0
    %771 = vperm.xlu0 %770, %v673
    %v772 = vpop.permute.xlu0 %771
    %775 = vset.pattern.permute.xlu0 0
    %776 = vperm.xlu0 %775, %v674
    %v777 = vpop.permute.xlu0 %776
    %780 = vset.pattern.permute.xlu0 0
    %781 = vperm.xlu0 %780, %v675
    %v782 = vpop.permute.xlu0 %781
    %785 = vset.pattern.permute.xlu0 0
    %786 = vperm.xlu0 %785, %v676
    %v787 = vpop.permute.xlu0 %786
    %790 = vset.pattern.permute.xlu0 0
    %791 = vperm.xlu0 %790, %v677
    %v792 = vpop.permute.xlu0 %791
    %795 = vset.pattern.permute.xlu0 0
    %796 = vperm.xlu0 %795, %v678
    %v797 = vpop.permute.xlu0 %796
    %800 = vset.pattern.permute.xlu0 0
    %801 = vperm.xlu0 %800, %v679
    %v802 = vpop.permute.xlu0 %801
    %805 = vset.pattern.permute.xlu0 0
    %806 = vperm.xlu0 %805, %v680
    %v807 = vpop.permute.xlu0 %806
    %810 = vset.pattern.permute.xlu0 0
    %811 = vperm.xlu0 %810, %v681
    %v812 = vpop.permute.xlu0 %811
    %815 = vset.pattern.permute.xlu0 0
    %816 = vperm.xlu0 %815, %v682
    %v817 = vpop.permute.xlu0 %816
    %820 = vset.pattern.permute.xlu0 0
    %821 = vperm.xlu0 %820, %v683
    %v822 = vpop.permute.xlu0 %821
    %825 = vset.pattern.permute.xlu0 0
    %826 = vperm.xlu0 %825, %v684
    %v827 = vpop.permute.xlu0 %826
    %830 = vset.pattern.permute.xlu0 0
    %831 = vperm.xlu0 %830, %v685
    %v832 = vpop.permute.xlu0 %831
    %835 = vset.pattern.permute.xlu0 0
    %836 = vperm.xlu0 %835, %v686
    %v837 = vpop.permute.xlu0 %836
    %840 = vset.pattern.permute.xlu0 0
    %841 = vperm.xlu0 %840, %v687
    %v842 = vpop.permute.xlu0 %841
    %845 = vset.pattern.permute.xlu0 0
    %846 = vperm.xlu0 %845, %v688
    %v847 = vpop.permute.xlu0 %846
    %v881 = vunpack.c.l.b16 %v609
    %v882 = vunpack.c.h.b16 %v609
    %v883 = vunpack.c.l.b16 %v610
    %v884 = vunpack.c.h.b16 %v610
    %v885 = vunpack.c.l.b16 %v611
    %v886 = vunpack.c.h.b16 %v611
    %v887 = vunpack.c.l.b16 %v612
    %v888 = vunpack.c.h.b16 %v612
    %v889 = vunpack.c.l.b16 %v613
    %v890 = vunpack.c.h.b16 %v613
    %v891 = vunpack.c.l.b16 %v614
    %v892 = vunpack.c.h.b16 %v614
    %v893 = vunpack.c.l.b16 %v615
    %v894 = vunpack.c.h.b16 %v615
    %v895 = vunpack.c.l.b16 %v616
    %v896 = vunpack.c.h.b16 %v616
    %v897 = vunpack.c.l.b16 %v617
    %v898 = vunpack.c.h.b16 %v617
    %v899 = vunpack.c.l.b16 %v618
    %v900 = vunpack.c.h.b16 %v618
    %v901 = vunpack.c.l.b16 %v619
    %v902 = vunpack.c.h.b16 %v619
    %v903 = vunpack.c.l.b16 %v620
    %v904 = vunpack.c.h.b16 %v620
    %v905 = vunpack.c.l.b16 %v621
    %v906 = vunpack.c.h.b16 %v621
    %v907 = vunpack.c.l.b16 %v622
    %v908 = vunpack.c.h.b16 %v622
    %v909 = vunpack.c.l.b16 %v623
    %v910 = vunpack.c.h.b16 %v623
    %v911 = vunpack.c.l.b16 %v624
    %v912 = vunpack.c.h.b16 %v624
    %v913 = vunpack.c.l.b16 %v625
    %v914 = vunpack.c.h.b16 %v625
    %v915 = vunpack.c.l.b16 %v626
    %v916 = vunpack.c.h.b16 %v626
    %v917 = vunpack.c.l.b16 %v627
    %v918 = vunpack.c.h.b16 %v627
    %v919 = vunpack.c.l.b16 %v628
    %v920 = vunpack.c.h.b16 %v628
    %v921 = vunpack.c.l.b16 %v629
    %v922 = vunpack.c.h.b16 %v629
    %v923 = vunpack.c.l.b16 %v630
    %v924 = vunpack.c.h.b16 %v630
    %v925 = vunpack.c.l.b16 %v631
    %v926 = vunpack.c.h.b16 %v631
    %v927 = vunpack.c.l.b16 %v632
    %v928 = vunpack.c.h.b16 %v632
    %v929 = vunpack.c.l.b16 %v633
    %v930 = vunpack.c.h.b16 %v633
    %v931 = vunpack.c.l.b16 %v634
    %v932 = vunpack.c.h.b16 %v634
    %v933 = vunpack.c.l.b16 %v635
    %v934 = vunpack.c.h.b16 %v635
    %v935 = vunpack.c.l.b16 %v636
    %v936 = vunpack.c.h.b16 %v636
    %v937 = vunpack.c.l.b16 %v637
    %v938 = vunpack.c.h.b16 %v637
    %v939 = vunpack.c.l.b16 %v638
    %v940 = vunpack.c.h.b16 %v638
    %v941 = vunpack.c.l.b16 %v639
    %v942 = vunpack.c.h.b16 %v639
    %v943 = vunpack.c.l.b16 %v640
    %v944 = vunpack.c.h.b16 %v640
    %v945 = vpack.c.b16 %v883, %v881
    %v946 = vpack.c.b16 %v884, %v882
    %v947 = vpack.c.b16 %v887, %v885
    %v948 = vpack.c.b16 %v888, %v886
    %v949 = vpack.c.b16 %v891, %v889
    %v950 = vpack.c.b16 %v892, %v890
    %v951 = vpack.c.b16 %v895, %v893
    %v952 = vpack.c.b16 %v896, %v894
    %v953 = vpack.c.b16 %v899, %v897
    %v954 = vpack.c.b16 %v900, %v898
    %v955 = vpack.c.b16 %v903, %v901
    %v956 = vpack.c.b16 %v904, %v902
    %v957 = vpack.c.b16 %v907, %v905
    %v958 = vpack.c.b16 %v908, %v906
    %v959 = vpack.c.b16 %v911, %v909
    %v960 = vpack.c.b16 %v912, %v910
    %v961 = vpack.c.b16 %v915, %v913
    %v962 = vpack.c.b16 %v916, %v914
    %v963 = vpack.c.b16 %v919, %v917
    %v964 = vpack.c.b16 %v920, %v918
    %v965 = vpack.c.b16 %v923, %v921
    %v966 = vpack.c.b16 %v924, %v922
    %v967 = vpack.c.b16 %v927, %v925
    %v968 = vpack.c.b16 %v928, %v926
    %v969 = vpack.c.b16 %v931, %v929
    %v970 = vpack.c.b16 %v932, %v930
    %v971 = vpack.c.b16 %v935, %v933
    %v972 = vpack.c.b16 %v936, %v934
    %v973 = vpack.c.b16 %v939, %v937
    %v974 = vpack.c.b16 %v940, %v938
    %v975 = vpack.c.b16 %v943, %v941
    %v976 = vpack.c.b16 %v944, %v942
    %1009 = vmatprep.subr.bf16.mxu0 0
    %1010 = vmatpush1.bf16.msra.mxu0 %v641
    %1011 = vmatprep.subr.bf16.mxu0 0
    %1012 = vmatpush1.bf16.msra.mxu0 %v642
    %1013 = vmatprep.subr.bf16.mxu0 0
    %1014 = vmatpush1.bf16.msra.mxu0 %v643
    %1015 = vmatprep.subr.bf16.mxu0 0
    %1016 = vmatpush1.bf16.msra.mxu0 %v644
    %1017 = vmatprep.subr.bf16.mxu0 0
    %1018 = vmatpush1.bf16.msra.mxu0 %v645
    %1019 = vmatprep.subr.bf16.mxu0 0
    %1020 = vmatpush1.bf16.msra.mxu0 %v646
    %1021 = vmatprep.subr.bf16.mxu0 0
    %1022 = vmatpush1.bf16.msra.mxu0 %v647
    %1023 = vmatprep.subr.bf16.mxu0 0
    %1024 = vmatpush1.bf16.msra.mxu0 %v648
    %1025 = vmatprep.subr.bf16.mxu0 0
    %1026 = vmatpush1.bf16.msra.mxu0 %v649
    %1027 = vmatprep.subr.bf16.mxu0 0
    %1028 = vmatpush1.bf16.msra.mxu0 %v650
    %1029 = vmatprep.subr.bf16.mxu0 0
    %1030 = vmatpush1.bf16.msra.mxu0 %v651
    %1031 = vmatprep.subr.bf16.mxu0 0
    %1032 = vmatpush1.bf16.msra.mxu0 %v652
    %1033 = vmatprep.subr.bf16.mxu0 0
    %1034 = vmatpush1.bf16.msra.mxu0 %v653
    %1035 = vmatprep.subr.bf16.mxu0 0
    %1036 = vmatpush1.bf16.msra.mxu0 %v654
    %1037 = vmatprep.subr.bf16.mxu0 0
    %1038 = vmatpush1.bf16.msra.mxu0 %v655
    %1039 = vmatprep.subr.bf16.mxu0 0
    %1040 = vmatpush1.bf16.msra.mxu0 %v656
    %1041 = vmatprep.mubr.bf16.mxu0 %v946
    %1042 = vmatmul.mubr.bf16.gmra.mrb[0].mxu0 %v945
    %v1043 = vpop.f32.mrb[0].mxu0
    %v1044 = vadd.f32 %v692, %v1043
    %v1045 = vpop.f32.mrb[0].mxu0
    %v1046 = vpop.f32.mrb[0].mxu0
    %v1047 = vadd.f32 %v697, %v1046
    %v1048 = vpop.f32.mrb[0].mxu0
    %1049 = vmatprep.mubr.bf16.mxu0 %v948
    %1050 = vmatmul.mubr.bf16.gmra.mrb[0].mxu0 %v947
    %v1051 = vpop.f32.mrb[0].mxu0
    %v1052 = vadd.f32 %v702, %v1051
    %v1053 = vpop.f32.mrb[0].mxu0
    %v1054 = vpop.f32.mrb[0].mxu0
    %v1055 = vadd.f32 %v707, %v1054
    %v1056 = vpop.f32.mrb[0].mxu0
    %1057 = vmatprep.mubr.bf16.mxu0 %v950
    %1058 = vmatmul.mubr.bf16.gmra.mrb[0].mxu0 %v949
    %v1059 = vpop.f32.mrb[0].mxu0
    %v1060 = vadd.f32 %v712, %v1059
    %v1061 = vpop.f32.mrb[0].mxu0
    %v1062 = vpop.f32.mrb[0].mxu0
    %v1063 = vadd.f32 %v717, %v1062
    %v1064 = vpop.f32.mrb[0].mxu0
    %1065 = vmatprep.mubr.bf16.mxu0 %v952
    %1066 = vmatmul.mubr.bf16.gmra.mrb[0].mxu0 %v951
    %v1067 = vpop.f32.mrb[0].mxu0
    %v1068 = vadd.f32 %v722, %v1067
    %v1069 = vpop.f32.mrb[0].mxu0
    %v1070 = vpop.f32.mrb[0].mxu0
    %v1071 = vadd.f32 %v727, %v1070
    %v1072 = vpop.f32.mrb[0].mxu0
    %1073 = vmatprep.mubr.bf16.mxu0 %v954
    %1074 = vmatmul.mubr.bf16.gmra.mrb[0].mxu0 %v953
    %v1075 = vpop.f32.mrb[0].mxu0
    %v1076 = vadd.f32 %v732, %v1075
    %v1077 = vpop.f32.mrb[0].mxu0
    %v1078 = vpop.f32.mrb[0].mxu0
    %v1079 = vadd.f32 %v737, %v1078
    %v1080 = vpop.f32.mrb[0].mxu0
    %1081 = vmatprep.mubr.bf16.mxu0 %v956
    %1082 = vmatmul.mubr.bf16.gmra.mrb[0].mxu0 %v955
    %v1083 = vpop.f32.mrb[0].mxu0
    %v1084 = vadd.f32 %v742, %v1083
    %v1085 = vpop.f32.mrb[0].mxu0
    %v1086 = vpop.f32.mrb[0].mxu0
    %v1087 = vadd.f32 %v747, %v1086
    %v1088 = vpop.f32.mrb[0].mxu0
    %1089 = vmatprep.mubr.bf16.mxu0 %v958
    %1090 = vmatmul.mubr.bf16.gmra.mrb[0].mxu0 %v957
    %v1091 = vpop.f32.mrb[0].mxu0
    %v1092 = vadd.f32 %v752, %v1091
    %v1093 = vpop.f32.mrb[0].mxu0
    %v1094 = vpop.f32.mrb[0].mxu0
    %v1095 = vadd.f32 %v757, %v1094
    %v1096 = vpop.f32.mrb[0].mxu0
    %1097 = vmatprep.mubr.bf16.mxu0 %v960
    %1098 = vmatmul.mubr.bf16.gmra.mrb[0].mxu0 %v959
    %v1099 = vpop.f32.mrb[0].mxu0
    %v1100 = vadd.f32 %v762, %v1099
    %v1101 = vpop.f32.mrb[0].mxu0
    %v1102 = vpop.f32.mrb[0].mxu0
    %v1103 = vadd.f32 %v767, %v1102
    %v1104 = vpop.f32.mrb[0].mxu0
    %1105 = vmatprep.mubr.bf16.mxu0 %v962
    %1106 = vmatmul.mubr.bf16.gmra.mrb[0].mxu0 %v961
    %v1107 = vpop.f32.mrb[0].mxu0
    %v1108 = vadd.f32 %v772, %v1107
    %v1109 = vpop.f32.mrb[0].mxu0
    %v1110 = vpop.f32.mrb[0].mxu0
    %v1111 = vadd.f32 %v777, %v1110
    %v1112 = vpop.f32.mrb[0].mxu0
    %1113 = vmatprep.mubr.bf16.mxu0 %v964
    %1114 = vmatmul.mubr.bf16.gmra.mrb[0].mxu0 %v963
    %v1115 = vpop.f32.mrb[0].mxu0
    %v1116 = vadd.f32 %v782, %v1115
    %v1117 = vpop.f32.mrb[0].mxu0
    %v1118 = vpop.f32.mrb[0].mxu0
    %v1119 = vadd.f32 %v787, %v1118
    %v1120 = vpop.f32.mrb[0].mxu0
    %1121 = vmatprep.mubr.bf16.mxu0 %v966
    %1122 = vmatmul.mubr.bf16.gmra.mrb[0].mxu0 %v965
    %v1123 = vpop.f32.mrb[0].mxu0
    %v1124 = vadd.f32 %v792, %v1123
    %v1125 = vpop.f32.mrb[0].mxu0
    %v1126 = vpop.f32.mrb[0].mxu0
    %v1127 = vadd.f32 %v797, %v1126
    %v1128 = vpop.f32.mrb[0].mxu0
    %1129 = vmatprep.mubr.bf16.mxu0 %v968
    %1130 = vmatmul.mubr.bf16.gmra.mrb[0].mxu0 %v967
    %v1131 = vpop.f32.mrb[0].mxu0
    %v1132 = vadd.f32 %v802, %v1131
    %v1133 = vpop.f32.mrb[0].mxu0
    %v1134 = vpop.f32.mrb[0].mxu0
    %v1135 = vadd.f32 %v807, %v1134
    %v1136 = vpop.f32.mrb[0].mxu0
    %1137 = vmatprep.mubr.bf16.mxu0 %v970
    %1138 = vmatmul.mubr.bf16.gmra.mrb[0].mxu0 %v969
    %v1139 = vpop.f32.mrb[0].mxu0
    %v1140 = vadd.f32 %v812, %v1139
    %v1141 = vpop.f32.mrb[0].mxu0
    %v1142 = vpop.f32.mrb[0].mxu0
    %v1143 = vadd.f32 %v817, %v1142
    %v1144 = vpop.f32.mrb[0].mxu0
    %1145 = vmatprep.mubr.bf16.mxu0 %v972
    %1146 = vmatmul.mubr.bf16.gmra.mrb[0].mxu0 %v971
    %v1147 = vpop.f32.mrb[0].mxu0
    %v1148 = vadd.f32 %v822, %v1147
    %v1149 = vpop.f32.mrb[0].mxu0
    %v1150 = vpop.f32.mrb[0].mxu0
    %v1151 = vadd.f32 %v827, %v1150
    %v1152 = vpop.f32.mrb[0].mxu0
    %1153 = vmatprep.mubr.bf16.mxu0 %v974
    %1154 = vmatmul.mubr.bf16.gmra.mrb[0].mxu0 %v973
    %v1155 = vpop.f32.mrb[0].mxu0
    %v1156 = vadd.f32 %v832, %v1155
    %v1157 = vpop.f32.mrb[0].mxu0
    %v1158 = vpop.f32.mrb[0].mxu0
    %v1159 = vadd.f32 %v837, %v1158
    %v1160 = vpop.f32.mrb[0].mxu0
    %1161 = vmatprep.mubr.bf16.mxu0 %v976
    %1162 = vmatmul.mubr.bf16.gmra.mrb[0].mxu0 %v975
    %v1163 = vpop.f32.mrb[0].mxu0
    %v1164 = vadd.f32 %v842, %v1163
    %v1165 = vpop.f32.mrb[0].mxu0
    %v1166 = vpop.f32.mrb[0].mxu0
    %v1167 = vadd.f32 %v847, %v1166
    %v1168 = vpop.f32.mrb[0].mxu0
    %1169 = vdwg.mxu0
    %v1170 = vmax.f32 %v1044, 0.0
    %v1171 = vmax.f32 %v1047, 0.0
    %v1172 = vmax.f32 %v1052, 0.0
    %v1173 = vmax.f32 %v1055, 0.0
    %v1174 = vmax.f32 %v1060, 0.0
    %v1175 = vmax.f32 %v1063, 0.0
    %v1176 = vmax.f32 %v1068, 0.0
    %v1177 = vmax.f32 %v1071, 0.0
    %v1178 = vmax.f32 %v1076, 0.0
    %v1179 = vmax.f32 %v1079, 0.0
    %v1180 = vmax.f32 %v1084, 0.0
    %v1181 = vmax.f32 %v1087, 0.0
    %v1182 = vmax.f32 %v1092, 0.0
    %v1183 = vmax.f32 %v1095, 0.0
    %v1184 = vmax.f32 %v1100, 0.0
    %v1185 = vmax.f32 %v1103, 0.0
    %v1186 = vmax.f32 %v1108, 0.0
    %v1187 = vmax.f32 %v1111, 0.0
    %v1188 = vmax.f32 %v1116, 0.0
    %v1189 = vmax.f32 %v1119, 0.0
    %v1190 = vmax.f32 %v1124, 0.0
    %v1191 = vmax.f32 %v1127, 0.0
    %v1192 = vmax.f32 %v1132, 0.0
    %v1193 = vmax.f32 %v1135, 0.0
    %v1194 = vmax.f32 %v1140, 0.0
    %v1195 = vmax.f32 %v1143, 0.0
    %v1196 = vmax.f32 %v1148, 0.0
    %v1197 = vmax.f32 %v1151, 0.0
    %v1198 = vmax.f32 %v1156, 0.0
    %v1199 = vmax.f32 %v1159, 0.0
    %v1200 = vmax.f32 %v1164, 0.0
    %v1201 = vmax.f32 %v1167, 0.0
    %v1202 = vld [vmem:[%s5] sm:$0xff]
    %v1203 = vld [vmem:[%s5 + $0x8] sm:$0xff]
    %v1204 = vld [vmem:[%s5 + $0x10] sm:$0xff]
    %v1205 = vld [vmem:[%s5 + $0x18] sm:$0xff]
    %v1206 = vld [vmem:[%s5 + $0x20] sm:$0xff]
    %v1207 = vld [vmem:[%s5 + $0x28] sm:$0xff]
    %v1208 = vld [vmem:[%s5 + $0x30] sm:$0xff]
    %v1209 = vld [vmem:[%s5 + $0x38] sm:$0xff]
    %v1210 = vld [vmem:[%s5 + $0x40] sm:$0xff]
    %v1211 = vld [vmem:[%s5 + $0x48] sm:$0xff]
    %v1212 = vld [vmem:[%s5 + $0x50] sm:$0xff]
    %v1213 = vld [vmem:[%s5 + $0x58] sm:$0xff]
    %v1214 = vld [vmem:[%s5 + $0x60] sm:$0xff]
    %v1215 = vld [vmem:[%s5 + $0x68] sm:$0xff]
    %v1216 = vld [vmem:[%s5 + $0x70] sm:$0xff]
    %v1217 = vld [vmem:[%s5 + $0x78] sm:$0xff]
    %v1218 = vld [vmem:[%s5 + $0x80] sm:$0xff]
    %v1219 = vld [vmem:[%s5 + $0x88] sm:$0xff]
    %v1220 = vld [vmem:[%s5 + $0x90] sm:$0xff]
    %v1221 = vld [vmem:[%s5 + $0x98] sm:$0xff]
    %v1222 = vld [vmem:[%s5 + $0xa0] sm:$0xff]
    %v1223 = vld [vmem:[%s5 + $0xa8] sm:$0xff]
    %v1224 = vld [vmem:[%s5 + $0xb0] sm:$0xff]
    %v1225 = vld [vmem:[%s5 + $0xb8] sm:$0xff]
    %v1226 = vld [vmem:[%s5 + $0xc0] sm:$0xff]
    %v1227 = vld [vmem:[%s5 + $0xc8] sm:$0xff]
    %v1228 = vld [vmem:[%s5 + $0xd0] sm:$0xff]
    %v1229 = vld [vmem:[%s5 + $0xd8] sm:$0xff]
    %v1230 = vld [vmem:[%s5 + $0xe0] sm:$0xff]
    %v1231 = vld [vmem:[%s5 + $0xe8] sm:$0xff]
    %v1232 = vld [vmem:[%s5 + $0xf0] sm:$0xff]
    %v1233 = vld [vmem:[%s5 + $0xf8] sm:$0xff]
    %1235 = vset.pattern.permute.xlu0 0
    %1236 = vperm.xlu0 %1235, %v1202
    %v1237 = vpop.permute.xlu0 %1236
    %1240 = vset.pattern.permute.xlu0 0
    %1241 = vperm.xlu0 %1240, %v1203
    %v1242 = vpop.permute.xlu0 %1241
    %1245 = vset.pattern.permute.xlu0 0
    %1246 = vperm.xlu0 %1245, %v1204
    %v1247 = vpop.permute.xlu0 %1246
    %1250 = vset.pattern.permute.xlu0 0
    %1251 = vperm.xlu0 %1250, %v1205
    %v1252 = vpop.permute.xlu0 %1251
    %1255 = vset.pattern.permute.xlu0 0
    %1256 = vperm.xlu0 %1255, %v1206
    %v1257 = vpop.permute.xlu0 %1256
    %1260 = vset.pattern.permute.xlu0 0
    %1261 = vperm.xlu0 %1260, %v1207
    %v1262 = vpop.permute.xlu0 %1261
    %1265 = vset.pattern.permute.xlu0 0
    %1266 = vperm.xlu0 %1265, %v1208
    %v1267 = vpop.permute.xlu0 %1266
    %1270 = vset.pattern.permute.xlu0 0
    %1271 = vperm.xlu0 %1270, %v1209
    %v1272 = vpop.permute.xlu0 %1271
    %1275 = vset.pattern.permute.xlu0 0
    %1276 = vperm.xlu0 %1275, %v1210
    %v1277 = vpop.permute.xlu0 %1276
    %1280 = vset.pattern.permute.xlu0 0
    %1281 = vperm.xlu0 %1280, %v1211
    %v1282 = vpop.permute.xlu0 %1281
    %1285 = vset.pattern.permute.xlu0 0
    %1286 = vperm.xlu0 %1285, %v1212
    %v1287 = vpop.permute.xlu0 %1286
    %1290 = vset.pattern.permute.xlu0 0
    %1291 = vperm.xlu0 %1290, %v1213
    %v1292 = vpop.permute.xlu0 %1291
    %1295 = vset.pattern.permute.xlu0 0
    %1296 = vperm.xlu0 %1295, %v1214
    %v1297 = vpop.permute.xlu0 %1296
    %1300 = vset.pattern.permute.xlu0 0
    %1301 = vperm.xlu0 %1300, %v1215
    %v1302 = vpop.permute.xlu0 %1301
    %1305 = vset.pattern.permute.xlu0 0
    %1306 = vperm.xlu0 %1305, %v1216
    %v1307 = vpop.permute.xlu0 %1306
    %1310 = vset.pattern.permute.xlu0 0
    %1311 = vperm.xlu0 %1310, %v1217
    %v1312 = vpop.permute.xlu0 %1311
    %1315 = vset.pattern.permute.xlu0 0
    %1316 = vperm.xlu0 %1315, %v1218
    %v1317 = vpop.permute.xlu0 %1316
    %1320 = vset.pattern.permute.xlu0 0
    %1321 = vperm.xlu0 %1320, %v1219
    %v1322 = vpop.permute.xlu0 %1321
    %1325 = vset.pattern.permute.xlu0 0
    %1326 = vperm.xlu0 %1325, %v1220
    %v1327 = vpop.permute.xlu0 %1326
    %1330 = vset.pattern.permute.xlu0 0
    %1331 = vperm.xlu0 %1330, %v1221
    %v1332 = vpop.permute.xlu0 %1331
    %1335 = vset.pattern.permute.xlu0 0
    %1336 = vperm.xlu0 %1335, %v1222
    %v1337 = vpop.permute.xlu0 %1336
    %1340 = vset.pattern.permute.xlu0 0
    %1341 = vperm.xlu0 %1340, %v1223
    %v1342 = vpop.permute.xlu0 %1341
    %1345 = vset.pattern.permute.xlu0 0
    %1346 = vperm.xlu0 %1345, %v1224
    %v1347 = vpop.permute.xlu0 %1346
    %1350 = vset.pattern.permute.xlu0 0
    %1351 = vperm.xlu0 %1350, %v1225
    %v1352 = vpop.permute.xlu0 %1351
    %1355 = vset.pattern.permute.xlu0 0
    %1356 = vperm.xlu0 %1355, %v1226
    %v1357 = vpop.permute.xlu0 %1356
    %1360 = vset.pattern.permute.xlu0 0
    %1361 = vperm.xlu0 %1360, %v1227
    %v1362 = vpop.permute.xlu0 %1361
    %1365 = vset.pattern.permute.xlu0 0
    %1366 = vperm.xlu0 %1365, %v1228
    %v1367 = vpop.permute.xlu0 %1366
    %1370 = vset.pattern.permute.xlu0 0
    %1371 = vperm.xlu0 %1370, %v1229
    %v1372 = vpop.permute.xlu0 %1371
    %1375 = vset.pattern.permute.xlu0 0
    %1376 = vperm.xlu0 %1375, %v1230
    %v1377 = vpop.permute.xlu0 %1376
    %1380 = vset.pattern.permute.xlu0 0
    %1381 = vperm.xlu0 %1380, %v1231
    %v1382 = vpop.permute.xlu0 %1381
    %1385 = vset.pattern.permute.xlu0 0
    %1386 = vperm.xlu0 %1385, %v1232
    %v1387 = vpop.permute.xlu0 %1386
    %1390 = vset.pattern.permute.xlu0 0
    %1391 = vperm.xlu0 %1390, %v1233
    %v1392 = vpop.permute.xlu0 %1391
    %v1394 = vmul.f32 %v1170, %v1237
    %v1395 = vmul.f32 %v1171, %v1242
    %v1396 = vmul.f32 %v1172, %v1247
    %v1397 = vmul.f32 %v1173, %v1252
    %v1398 = vmul.f32 %v1174, %v1257
    %v1399 = vmul.f32 %v1175, %v1262
    %v1400 = vmul.f32 %v1176, %v1267
    %v1401 = vmul.f32 %v1177, %v1272
    %v1402 = vmul.f32 %v1178, %v1277
    %v1403 = vmul.f32 %v1179, %v1282
    %v1404 = vmul.f32 %v1180, %v1287
    %v1405 = vmul.f32 %v1181, %v1292
    %v1406 = vmul.f32 %v1182, %v1297
    %v1407 = vmul.f32 %v1183, %v1302
    %v1408 = vmul.f32 %v1184, %v1307
    %v1409 = vmul.f32 %v1185, %v1312
    %v1410 = vmul.f32 %v1186, %v1317
    %v1411 = vmul.f32 %v1187, %v1322
    %v1412 = vmul.f32 %v1188, %v1327
    %v1413 = vmul.f32 %v1189, %v1332
    %v1414 = vmul.f32 %v1190, %v1337
    %v1415 = vmul.f32 %v1191, %v1342
    %v1416 = vmul.f32 %v1192, %v1347
    %v1417 = vmul.f32 %v1193, %v1352
    %v1418 = vmul.f32 %v1194, %v1357
    %v1419 = vmul.f32 %v1195, %v1362
    %v1420 = vmul.f32 %v1196, %v1367
    %v1421 = vmul.f32 %v1197, %v1372
    %v1422 = vmul.f32 %v1198, %v1377
    %v1423 = vmul.f32 %v1199, %v1382
    %v1424 = vmul.f32 %v1200, %v1387
    %v1425 = vmul.f32 %v1201, %v1392
    %v1426 = vadd.f32 %v1394, %v1395
    %v1427 = vadd.f32 %v1426, %v1396
    %v1428 = vadd.f32 %v1427, %v1397
    %v1429 = vadd.f32 %v1428, %v1398
    %v1430 = vadd.f32 %v1429, %v1399
    %v1431 = vadd.f32 %v1430, %v1400
    %v1432 = vadd.f32 %v1431, %v1401
    %v1433 = vadd.f32 %v1432, %v1402
    %v1434 = vadd.f32 %v1433, %v1403
    %v1435 = vadd.f32 %v1434, %v1404
    %v1436 = vadd.f32 %v1435, %v1405
    %v1437 = vadd.f32 %v1436, %v1406
    %v1438 = vadd.f32 %v1437, %v1407
    %v1439 = vadd.f32 %v1438, %v1408
    %v1440 = vadd.f32 %v1439, %v1409
    %v1441 = vadd.f32 %v1440, %v1410
    %v1442 = vadd.f32 %v1441, %v1411
    %v1443 = vadd.f32 %v1442, %v1412
    %v1444 = vadd.f32 %v1443, %v1413
    %v1445 = vadd.f32 %v1444, %v1414
    %v1446 = vadd.f32 %v1445, %v1415
    %v1447 = vadd.f32 %v1446, %v1416
    %v1448 = vadd.f32 %v1447, %v1417
    %v1449 = vadd.f32 %v1448, %v1418
    %v1450 = vadd.f32 %v1449, %v1419
    %v1451 = vadd.f32 %v1450, %v1420
    %v1452 = vadd.f32 %v1451, %v1421
    %v1453 = vadd.f32 %v1452, %v1422
    %v1454 = vadd.f32 %v1453, %v1423
    %v1455 = vadd.f32 %v1454, %v1424
    %v1456 = vadd.f32 %v1455, %v1425
    %v1457 = vrot.slane %v1456, 4
    %v1458 = vadd.f32 %v1456, %v1457
    %v1459 = vrot.slane %v1458, 2
    %v1460 = vadd.f32 %v1458, %v1459
    %v1461 = vrot.slane %v1460, 1
    %v1462 = vadd.f32 %v1460, %v1461
    %v1463 = vld [vmem:[#allocation2] sm:$0x1]
    %1465 = vset.pattern.permute.xlu0 0
    %1466 = vperm.xlu0 %1465, %v1463
    %v1467 = vpop.permute.xlu0 %1466
    %v1469 = vlaneseq
    %v1470 = vshrl.u32 %v1469, 7
    %v1471 = vsub.s32 0, %v1470
    %v1472 = vrot.slane %v1467, %v1471
    %v1473 = vadd.f32 %v1462, %v1472
    %1474 = vst [vmem:[#allocation3] sm:$0x1] %v1473
    // Predicated region
    $region30: #{tpu_custom_call.1} parent=1 // pred_check
      _
    $region31: #{tpu_custom_call.1} parent=1 // pred_check_branch
      %1476 = sbr.rel (0) target = $region33
    $region32: #{tpu_custom_call.1} parent=1 // pred_region
      %s1478 = ssub.s32 16, 16
      %1479 = vsyncadd [#allocation4], %s1478
      %s1481 = sshll.u32 [#allocation3], 4
      %s1482 = int_to_ptr.vmem [resolvable:$true] %s1481
      %1484 = dma.vmem_to_hbm [thread:$0]  %s1482, 16, %s7, [#allocation4]
    $region33: #{tpu_custom_call.1} parent=1 // pred_fallthru
      _
    // Predicated region
    $region34: #{tpu_custom_call.1} parent=1 // pred_check
      _
    $region35: #{tpu_custom_call.1} parent=1 // pred_check_branch
      %1486 = sbr.rel (0) target = $region37
    $region36: #{tpu_custom_call.1} parent=1 // pred_region
      %1487 = dma.done [#allocation4], 16
    $region37: #{tpu_custom_call.1} parent=1 // pred_fallthru
      _
    %1488 = vsyncpa [#allocation4], 1

</llo_original>
